<compile_context>
chip_gen: v7x
topology: tpu7x:2x2x1
jax: 0.10.0
libtpu: 0.0.40
codegen_flags: <defaults>
</compile_context>

<pallas_src>
import functools

import jax
import jax.numpy as jnp
import numpy as np
from jax import lax
from jax.experimental import pallas as pl
from jax.experimental.pallas import tpu as pltpu

N_FEATURES = 1536   # EfficientNet-B3 feature width (self.n_features)
PATCH = 2           # patchify kernel/stride of the backbone stand-in
MAX_TILE_S = 1024   # spatial rows per grid step (6 MiB f32 intermediate)


def _silu(x):
    # x * sigmoid(x) == 0.5 * x * (1 + tanh(x/2)): exactly one EUP op / element.
    return 0.5 * x * (1.0 + jnp.tanh(0.5 * x))


# ----------------------------- fused Pallas kernel ---------------------------

def _fused_kernel(p_ref, w_ref, b_ref, hw_ref, hb_ref, o_ref, acc_ref,
                  *, s_valid, tile_s, n_pad):
    # p_ref : (1, tile_s, K) bf16   im2col patches for one (batch, spatial-tile)
    # w_ref : (K, C) bf16           stem weight     b_ref : (1, C) f32 stem bias
    # hw_ref: (1, C) f32            head weight (lane-dense layout)
    # hb_ref: (1, 1) f32            head bias
    # o_ref : (1, 1, 1) f32         per-batch scalar output
    # acc_ref: (1, C) f32           running spatial sum (pooling numerator)
    s = pl.program_id(1)
    n_s = pl.num_programs(1)

    @pl.when(s == 0)
    def _init():
        acc_ref[...] = jnp.zeros_like(acc_ref)

    # patchify conv (bf16 MXU, f32 accumulate) + bias + SiLU — no padding mask.
    x = jnp.dot(p_ref[0], w_ref[...], preferred_element_type=jnp.float32)
    x = x + b_ref[...]
    x = _silu(x)

    # spatial row-sum on the (mostly idle) MXU instead of the VPU.
    ones_row = jnp.ones((1, tile_s), jnp.float32)
    acc_ref[...] += jnp.dot(ones_row, x, preferred_element_type=jnp.float32)

    @pl.when(s == n_s - 1)
    def _finalize():
        acc = acc_ref[...]
        if n_pad:  # static python check; padded rows contribute exactly SiLU(b)
            acc = acc - jnp.float32(n_pad) * _silu(b_ref[...])
        pooled = acc * (1.0 / float(s_valid))                    # mean over S
        out = jnp.sum(pooled * hw_ref[...], axis=-1, keepdims=True) + hb_ref[...]
        o_ref[...] = out[None]                                   # (1, 1, 1)


# ------------------------------ pallas_call glue -----------------------------

def base_model_forward(image, params):
    """image: (B, 3, H, W) NCHW float32  ->  (B, 1) estimated counts."""
    B, Cin, H, W = image.shape
    Hp, Wp = H // PATCH, W // PATCH
    S = Hp * Wp
    K = PATCH * PATCH * Cin

    # glue: NCHW -> NHWC -> im2col of non-overlapping PxP patches, per batch.
    x = jnp.transpose(image, (0, 2, 3, 1))                        # (B, H, W, Cin)
    x = x.reshape(B, Hp, PATCH, Wp, PATCH, Cin)
    x = jnp.transpose(x, (0, 1, 3, 2, 4, 5))
    patches = x.reshape(B, S, K).astype(jnp.bfloat16)             # (B, S, K) bf16

    # spatial tiling: multiple of 16 sublanes (bf16 packing), capped, zero-padded.
    tile_s = min(MAX_TILE_S, ((S + 15) // 16) * 16)
    s_pad = ((S + tile_s - 1) // tile_s) * tile_s
    n_pad = s_pad - S
    if n_pad:
        patches = jnp.pad(patches, ((0, 0), (0, n_pad), (0, 0)))

    stem_w = params["stem_w"].astype(jnp.bfloat16)

    kernel = functools.partial(_fused_kernel, s_valid=S, tile_s=tile_s,
                               n_pad=n_pad)

    # VMEM budget from the actual footprint (dominant: ~3 copies of the
    # (tile_s, 1536) f32 intermediate), clamped to stay under v7x's 64 MiB.
    vmem_limit = int(min(56 * 1024 * 1024,
                         max(16 * 1024 * 1024,
                             3 * tile_s * N_FEATURES * 4 + 4 * 1024 * 1024)))

    out = pl.pallas_call(
        kernel,
        out_shape=jax.ShapeDtypeStruct((B, 1, 1), jnp.float32),
        grid=(B, s_pad // tile_s),
        in_specs=[
            pl.BlockSpec((1, tile_s, K), lambda b, s: (b, s, 0)),
            pl.BlockSpec((K, N_FEATURES), lambda b, s: (0, 0)),
            pl.BlockSpec((1, N_FEATURES), lambda b, s: (0, 0)),
            pl.BlockSpec((1, N_FEATURES), lambda b, s: (0, 0)),
            pl.BlockSpec((1, 1), lambda b, s: (0, 0)),
        ],
        out_specs=pl.BlockSpec((1, 1, 1), lambda b, s: (b, 0, 0)),
        scratch_shapes=[pltpu.VMEM((1, N_FEATURES), jnp.float32)],
        compiler_params=pltpu.CompilerParams(
            dimension_semantics=("parallel", "arbitrary"),
            vmem_limit_bytes=vmem_limit,
        ),
    )(patches, stem_w, params["stem_b"], params["head_w"], params["head_b"])

    return out.reshape(B, 1)


# --------------------------------- params ------------------------------------

def init_params(key):
    k1, k2, k3, _ = jax.random.split(key, 4)
    kdim = PATCH * PATCH * 3
    return {
        "stem_w": jax.random.normal(k1, (kdim, N_FEATURES), jnp.float32) * 0.05,
        "stem_b": jax.random.normal(k2, (1, N_FEATURES), jnp.float32) * 0.01,
        # head weight stored lane-dense as (1, C)
        "head_w": jax.random.normal(k3, (1, N_FEATURES), jnp.float32)
                  / jnp.sqrt(jnp.float32(N_FEATURES)),
        "head_b": jnp.zeros((1, 1), jnp.float32),
    }


# -------------------------------- reference ----------------------------------

def _reference_forward(image, params):
    B, Cin, H, W = image.shape
    Hp, Wp = H // PATCH, W // PATCH
    x = jnp.transpose(image, (0, 2, 3, 1)).reshape(B, Hp, PATCH, Wp, PATCH, Cin)
    x = jnp.transpose(x, (0, 1, 3, 2, 4, 5)).reshape(B * Hp * Wp, -1)
    # mirror the kernel's bf16 operand quantization (f32 accumulation elsewhere)
    x = x.astype(jnp.bfloat16).astype(jnp.float32)
    w = params["stem_w"].astype(jnp.bfloat16).astype(jnp.float32)
    f = jnp.dot(x, w, precision=lax.Precision.HIGHEST) + params["stem_b"]
    f = f * jax.nn.sigmoid(f)
    f = f.reshape(B, Hp * Wp, N_FEATURES).mean(axis=1)
    return jnp.sum(f * params["head_w"], axis=-1, keepdims=True) + params["head_b"]


if __name__ == "__main__":
    key = jax.random.PRNGKey(0)
    k_param, k_img1, k_img2 = jax.random.split(key, 3)

    params = init_params(k_param)

    # main small test: (B=2, 3, 16, 16) -> S = 64 spatial positions (no padding)
    image = jax.random.normal(k_img1, (2, 3, 16, 16), jnp.float32)
    out = jax.block_until_ready(base_model_forward(image, params))
    ref = _reference_forward(image, params)
    np.testing.assert_allclose(np.asarray(out), np.asarray(ref),
                               rtol=1e-3, atol=1e-3)
    assert out.shape == (2, 1)

    # exercise the padding-correction path: S = 9 (not a multiple of the tile)
    image2 = jax.random.normal(k_img2, (2, 3, 6, 6), jnp.float32)
    out2 = jax.block_until_ready(base_model_forward(image2, params))
    ref2 = _reference_forward(image2, params)
    np.testing.assert_allclose(np.asarray(out2), np.asarray(ref2),
                               rtol=1e-3, atol=1e-3)

    print("KERNEL_OK")
</pallas_src>

<mosaic_0001>
module attributes {stable_mosaic.version = 11 : i64} {
  func.func @_fused_kernel(%arg0: i32, %arg1: i32, %arg2: memref<1x64x12xbf16, #tpu.memory_space<vmem>>, %arg3: memref<12x1536xbf16, #tpu.memory_space<vmem>>, %arg4: memref<1x1536xf32, #tpu.memory_space<vmem>>, %arg5: memref<1x1536xf32, #tpu.memory_space<vmem>>, %arg6: memref<1x1xf32, #tpu.memory_space<vmem>>, %arg7: memref<1x1x1xf32, #tpu.memory_space<vmem>>, %arg8: memref<1x1536xf32, #tpu.memory_space<vmem>>) attributes {dimension_semantics = [#tpu.dimension_semantics<parallel>, #tpu.dimension_semantics<arbitrary>], iteration_bounds = array<i64: 2, 1>, scalar_prefetch = 0 : i64, scratch_operands = 1 : i64, tpu.core_type = #tpu.core_type<tc>, window_params = [{transform_indices = @transform_0, window_bounds = array<i64: 1, 64, 12>}, {pipeline_mode = #tpu.pipeline_mode<synchronous>, transform_indices = @transform_1, window_bounds = array<i64: 12, 1536>}, {pipeline_mode = #tpu.pipeline_mode<synchronous>, transform_indices = @transform_2, window_bounds = array<i64: 1, 1536>}, {pipeline_mode = #tpu.pipeline_mode<synchronous>, transform_indices = @transform_3, window_bounds = array<i64: 1, 1536>}, {pipeline_mode = #tpu.pipeline_mode<synchronous>, transform_indices = @transform_4, window_bounds = array<i64: 1, 1>}, {transform_indices = @transform_5, window_bounds = array<i64: 1, 1, 1>}]} {
    %c0_i32 = arith.constant 0 : i32
    %0 = arith.cmpi eq, %arg1, %c0_i32 : i32
    %1 = arith.extui %0 : i1 to i32
    %c0_i32_0 = arith.constant 0 : i32
    %2 = arith.cmpi ne, %1, %c0_i32_0 : i32
    scf.if %2 {
      %cst_18 = arith.constant 0.000000e+00 : f32
      %26 = vector.broadcast %cst_18 : f32 to vector<1x1536xf32>
      %c0_19 = arith.constant 0 : index
      %c0_20 = arith.constant 0 : index
      %27 = vector.load %arg8[%c0_19, %c0_20] : memref<1x1536xf32, #tpu.memory_space<vmem>>, vector<1x1536xf32>
      tpu.vector_store %arg8[%c0_19, %c0_20], %26 {strides = array<i32>} : memref<1x1536xf32, #tpu.memory_space<vmem>>, vector<1x1536xf32>,
    } else {
    }
    %c0 = arith.constant 0 : index
    %c0_1 = arith.constant 0 : index
    %c0_2 = arith.constant 0 : index
    %3 = vector.load %arg2[%c0, %c0_1, %c0_2] : memref<1x64x12xbf16, #tpu.memory_space<vmem>>, vector<1x64x12xbf16>
    %4 = vector.shape_cast %3 : vector<1x64x12xbf16> to vector<64x12xbf16>
    %c0_3 = arith.constant 0 : index
    %c0_4 = arith.constant 0 : index
    %5 = vector.load %arg3[%c0_3, %c0_4] : memref<12x1536xbf16, #tpu.memory_space<vmem>>, vector<12x1536xbf16>
    %cst = arith.constant dense<0.000000e+00> : vector<64x1536xf32>
    %6 = tpu.matmul %4, %5, %cst {dimension_numbers = #tpu.dot_dimension_numbers<[1], [0], [0], [1], [0, 0, 1, 1], [], []>} : vector<64x12xbf16>, vector<12x1536xbf16>, vector<64x1536xf32> -> vector<64x1536xf32>
    %c0_5 = arith.constant 0 : index
    %c0_6 = arith.constant 0 : index
    %7 = vector.load %arg4[%c0_5, %c0_6] : memref<1x1536xf32, #tpu.memory_space<vmem>>, vector<1x1536xf32>
    %8 = vector.broadcast %7 : vector<1x1536xf32> to vector<64x1536xf32>
    %9 = arith.addf %6, %8 : vector<64x1536xf32>
    %cst_7 = arith.constant 5.000000e-01 : f32
    %10 = vector.broadcast %cst_7 : f32 to vector<64x1536xf32>
    %11 = arith.mulf %10, %9 : vector<64x1536xf32>
    %cst_8 = arith.constant 5.000000e-01 : f32
    %12 = vector.broadcast %cst_8 : f32 to vector<64x1536xf32>
    %13 = arith.mulf %12, %9 : vector<64x1536xf32>
    %14 = math.tanh %13 : vector<64x1536xf32>
    %cst_9 = arith.constant 1.000000e+00 : f32
    %15 = vector.broadcast %cst_9 : f32 to vector<64x1536xf32>
    %16 = arith.addf %15, %14 : vector<64x1536xf32>
    %17 = arith.mulf %11, %16 : vector<64x1536xf32>
    %cst_10 = arith.constant 1.000000e+00 : f32
    %18 = vector.broadcast %cst_10 : f32 to vector<1x64xf32>
    %c0_11 = arith.constant 0 : index
    %c0_12 = arith.constant 0 : index
    %19 = vector.load %arg8[%c0_11, %c0_12] : memref<1x1536xf32, #tpu.memory_space<vmem>>, vector<1x1536xf32>
    %cst_13 = arith.constant dense<0.000000e+00> : vector<1x1536xf32>
    %20 = tpu.matmul %18, %17, %cst_13 {dimension_numbers = #tpu.dot_dimension_numbers<[1], [0], [0], [1], [0, 0, 1, 1], [], []>} : vector<1x64xf32>, vector<64x1536xf32>, vector<1x1536xf32> -> vector<1x1536xf32>
    %21 = arith.addf %19, %20 : vector<1x1536xf32>
    %c0_14 = arith.constant 0 : index
    %c0_15 = arith.constant 0 : index
    %22 = vector.load %arg8[%c0_14, %c0_15] : memref<1x1536xf32, #tpu.memory_space<vmem>>, vector<1x1536xf32>
    tpu.vector_store %arg8[%c0_14, %c0_15], %21 {strides = array<i32>} : memref<1x1536xf32, #tpu.memory_space<vmem>>, vector<1x1536xf32>,
    %c0_i32_16 = arith.constant 0 : i32
    %23 = arith.cmpi eq, %arg1, %c0_i32_16 : i32
    %24 = arith.extui %23 : i1 to i32
    %c0_i32_17 = arith.constant 0 : i32
    %25 = arith.cmpi ne, %24, %c0_i32_17 : i32
    scf.if %25 {
      %c0_18 = arith.constant 0 : index
      %c0_19 = arith.constant 0 : index
      %26 = vector.load %arg8[%c0_18, %c0_19] : memref<1x1536xf32, #tpu.memory_space<vmem>>, vector<1x1536xf32>
      %cst_20 = arith.constant 1.562500e-02 : f32
      %27 = vector.broadcast %cst_20 : f32 to vector<1x1536xf32>
      %28 = arith.mulf %26, %27 : vector<1x1536xf32>
      %c0_21 = arith.constant 0 : index
      %c0_22 = arith.constant 0 : index
      %29 = vector.load %arg5[%c0_21, %c0_22] : memref<1x1536xf32, #tpu.memory_space<vmem>>, vector<1x1536xf32>
      %30 = arith.mulf %28, %29 : vector<1x1536xf32>
      %cst_23 = arith.constant dense<0.000000e+00> : vector<1xf32>
      %31 = vector.multi_reduction <add>, %30, %cst_23 [1] : vector<1x1536xf32> to vector<1xf32>
      %32 = vector.shape_cast %31 : vector<1xf32> to vector<1x1xf32>
      %c0_24 = arith.constant 0 : index
      %c0_25 = arith.constant 0 : index
      %33 = vector.load %arg6[%c0_24, %c0_25] : memref<1x1xf32, #tpu.memory_space<vmem>>, vector<1x1xf32>
      %34 = arith.addf %32, %33 : vector<1x1xf32>
      %35 = vector.shape_cast %34 : vector<1x1xf32> to vector<1x1x1xf32>
      %c0_26 = arith.constant 0 : index
      %c0_27 = arith.constant 0 : index
      %c0_28 = arith.constant 0 : index
      %36 = vector.load %arg7[%c0_26, %c0_27, %c0_28] : memref<1x1x1xf32, #tpu.memory_space<vmem>>, vector<1x1x1xf32>
      tpu.vector_store %arg7[%c0_26, %c0_27, %c0_28], %35 {strides = array<i32>} : memref<1x1x1xf32, #tpu.memory_space<vmem>>, vector<1x1x1xf32>,
    } else {
    }
    return
  }
  func.func @transform_0(%arg0: i32, %arg1: i32) -> (i32, i32, i32) {
    %c0_i32 = arith.constant 0 : i32
    %c0_i32_0 = arith.constant 0 : i32
    return %arg0, %arg1, %c0_i32 : i32, i32, i32
  }
  func.func @transform_1(%arg0: i32, %arg1: i32) -> (i32, i32) {
    %c0_i32 = arith.constant 0 : i32
    %c0_i32_0 = arith.constant 0 : i32
    %c0_i32_1 = arith.constant 0 : i32
    return %c0_i32, %c0_i32_0 : i32, i32
  }
  func.func @transform_2(%arg0: i32, %arg1: i32) -> (i32, i32) {
    %c0_i32 = arith.constant 0 : i32
    %c0_i32_0 = arith.constant 0 : i32
    %c0_i32_1 = arith.constant 0 : i32
    return %c0_i32, %c0_i32_0 : i32, i32
  }
  func.func @transform_3(%arg0: i32, %arg1: i32) -> (i32, i32) {
    %c0_i32 = arith.constant 0 : i32
    %c0_i32_0 = arith.constant 0 : i32
    %c0_i32_1 = arith.constant 0 : i32
    return %c0_i32, %c0_i32_0 : i32, i32
  }
  func.func @transform_4(%arg0: i32, %arg1: i32) -> (i32, i32) {
    %c0_i32 = arith.constant 0 : i32
    %c0_i32_0 = arith.constant 0 : i32
    %c0_i32_1 = arith.constant 0 : i32
    return %c0_i32, %c0_i32_0 : i32, i32
  }
  func.func @transform_5(%arg0: i32, %arg1: i32) -> (i32, i32, i32) {
    %c0_i32 = arith.constant 0 : i32
    %c0_i32_0 = arith.constant 0 : i32
    %c0_i32_1 = arith.constant 0 : i32
    return %arg0, %c0_i32, %c0_i32_0 : i32, i32, i32
  }
}

</mosaic_0001>

<llo_original>
// kernel: tpu_custom_call.1
$region0: #{tpu_custom_call.1}
  #allocation0 [shape = 'u32[]', space=smem, size = 0x4, offset = 0x4, fixed_abs, tag = 'smem constant byte address 0x4 - core index']
  #allocation1 [shape = 'u32[144,128]{1,0:T(1,128)}', space=vmem, size = 0x12000, scoped, tag = 'internal scratch']
  #allocation2 [shape = 'f32[1,1536]{1,0:T(1,128)}', space=vmem, size = 0x1800, scoped, tag = 'scratch operand']
  #allocation3 [shape = 'f32[1,1]{1,0:T(1,128)S(1)}', space=vmem, size = 0x200, scoped, tag = 'scoped memory for tpu_custom_call.1']
  %s0 = inlined_call_operand.vmem [shape: bf16[2,64,12], index: 0, kind: input, shape index: {}]
  %s1 = inlined_call_operand.hbm [shape: bf16[12,1536], index: 1, kind: input, shape index: {}]
  %s2 = inlined_call_operand.vmem [shape: f32[1,1536], index: 2, kind: input, shape index: {}]
  %s3 = inlined_call_operand.vmem [shape: f32[1,1536], index: 3, kind: input, shape index: {}]
  %s4 = inlined_call_operand.<no memory space> [shape: f32[1,1], index: 4, kind: input, shape index: {}]
  %s5 = inlined_call_operand.vmem [shape: f32[2,1,1], index: 5, kind: output, shape index: {}]
  %s6 = sld [smem:[#allocation0]]
  $region65: #{tpu_custom_call.1} parent=0
    _
  %s8 = ssub.s32 1, %s6
  %s9 = scalar_select 0, %s8, %s6
  %v10 = vstv %s4
  %11 = vst [vmem:[#allocation3] sm:$0x1] %v10
  $region1: #{tpu_custom_call.1} parent=0
    #allocation4 [shape = 'u8[49152]{0}', space=vmem, size = 0xc000, scoped, tag = 'input window, operand 1, single buffered']
    #allocation5 [shape = 's32[2]{0}', space=sflag, size = 0x8, scoped, tag = 'scoped memory for tpu_custom_call.1']
    %12 = vsyncpa [#allocation5], 0
    loop: start=0, step=1, limit=4
    $region2: #{tpu_custom_call.1} parent=1 // loop_pre_header
      _
    $region3: #{tpu_custom_call.1} parent=1 // loop_header
      %s14 = sphi 0, %s18
      %p15 = scmp.ge.s32.totalorder %s14, 4
      %s21 = sphi 0, %s33
      %s22 = sphi 0, %s29
      %s23 = sphi 0, %s21
      %s24 = sphi 0, %s22
      %s25 = sphi 0, %s23
      %s26 = sphi 0, %s24
      %s38 = sphi 0, %s40
      %s41 = sphi 0, %s38
      %s42 = sphi 0, %s41
      %s58 = sphi 0, %s42
      %s62 = sphi 0, %s62
      %s64 = sphi 0, %s62
      %s65 = sphi 0, %s64
      %s79 = sphi 0, %s65
      %s83 = sphi 0, %s83
      %s85 = sphi 0, %s83
      %s86 = sphi 0, %s85
      %s100 = sphi 0, %s86
      %s104 = sphi 0, %s104
      %s106 = sphi 0, %s104
      %s107 = sphi 0, %s106
      %s121 = sphi 0, %s107
      %s125 = sphi 0, %s125
      %s127 = sphi 0, %s125
      %s128 = sphi 0, %s127
      %s142 = sphi 0, %s128
      %s148 = sphi 0, %s150
      %s151 = sphi 0, %s148
      %s152 = sphi 0, %s151
      %s168 = sphi 0, %s152
    $region4: #{tpu_custom_call.1} parent=1 // loop_header_branch
      %17 = sbr.rel (%p15) target = $region8
    $region5: #{tpu_custom_call.1} parent=1 // loop_body
      %s19 = ssub.s32 %s14, 1
      %s20 = ssub.s32 %s14, 2
      %s27 = sadd.s32 1, %s22
      %p28 = scmp.ge.s32.totalorder %s27, 1
      %s29 = scalar_select %p28, 0, %s27
      %s30 = sadd.s32 1, %s21
      %s31 = scalar_select %p28, %s30, %s21
      %p32 = scmp.ge.s32.totalorder %s31, 2
      %s33 = scalar_select %p32, 0, %s31
      %s34 = ssub.s32 %s21, %s33
      %s35 = ssub.s32 %s22, %s29
      %s36 = sor.u32 %s34, %s35
      %p37 = scmp.eq.s32.totalorder %s36, 0
      %s39 = sadd.s32 %s38, 1
      %s40 = scalar_select %p37, %s38, %s39
      %p43 = pneg %p37
      %p44 = scmp.eq.s32.totalorder %s14, 1
      %p45 = por %p43, %p44
      %p46 = scmp.ne.s32.totalorder %s38, %s41
      %p47 = scmp.eq.s32.totalorder %s14, 0
      %p48 = por %p46, %p47
      %p49 = scmp.ne.s32.totalorder %s38, %s41
      %p50 = scmp.eq.s32.totalorder %s19, 1
      %p51 = por %p49, %p50
      %p52 = scmp.ne.s32.totalorder %s41, %s42
      %p53 = scmp.eq.s32.totalorder %s19, 0
      %p54 = por %p52, %p53
      %p55 = scmp.ne.s32.totalorder %s41, %s42
      %p56 = scmp.eq.s32.totalorder %s20, 1
      %p57 = por %p55, %p56
      %p59 = scmp.ne.s32.totalorder %s42, %s58
      %p60 = scmp.eq.s32.totalorder %s20, 0
      %p61 = por %p59, %p60
      %s63 = sadd.s32 %s62, 1
      %p66 = scmp.eq.s32.totalorder %s14, 1
      %p67 = scmp.ne.s32.totalorder %s62, %s64
      %p68 = scmp.eq.s32.totalorder %s14, 0
      %p69 = por %p67, %p68
      %p70 = scmp.ne.s32.totalorder %s62, %s64
      %p71 = scmp.eq.s32.totalorder %s19, 1
      %p72 = por %p70, %p71
      %p73 = scmp.ne.s32.totalorder %s64, %s65
      %p74 = scmp.eq.s32.totalorder %s19, 0
      %p75 = por %p73, %p74
      %p76 = scmp.ne.s32.totalorder %s64, %s65
      %p77 = scmp.eq.s32.totalorder %s20, 1
      %p78 = por %p76, %p77
      %p80 = scmp.ne.s32.totalorder %s65, %s79
      %p81 = scmp.eq.s32.totalorder %s20, 0
      %p82 = por %p80, %p81
      %s84 = sadd.s32 %s83, 1
      %p87 = scmp.eq.s32.totalorder %s14, 1
      %p88 = scmp.ne.s32.totalorder %s83, %s85
      %p89 = scmp.eq.s32.totalorder %s14, 0
      %p90 = por %p88, %p89
      %p91 = scmp.ne.s32.totalorder %s83, %s85
      %p92 = scmp.eq.s32.totalorder %s19, 1
      %p93 = por %p91, %p92
      %p94 = scmp.ne.s32.totalorder %s85, %s86
      %p95 = scmp.eq.s32.totalorder %s19, 0
      %p96 = por %p94, %p95
      %p97 = scmp.ne.s32.totalorder %s85, %s86
      %p98 = scmp.eq.s32.totalorder %s20, 1
      %p99 = por %p97, %p98
      %p101 = scmp.ne.s32.totalorder %s86, %s100
      %p102 = scmp.eq.s32.totalorder %s20, 0
      %p103 = por %p101, %p102
      %s105 = sadd.s32 %s104, 1
      %p108 = scmp.eq.s32.totalorder %s14, 1
      %p109 = scmp.ne.s32.totalorder %s104, %s106
      %p110 = scmp.eq.s32.totalorder %s14, 0
      %p111 = por %p109, %p110
      %p112 = scmp.ne.s32.totalorder %s104, %s106
      %p113 = scmp.eq.s32.totalorder %s19, 1
      %p114 = por %p112, %p113
      %p115 = scmp.ne.s32.totalorder %s106, %s107
      %p116 = scmp.eq.s32.totalorder %s19, 0
      %p117 = por %p115, %p116
      %p118 = scmp.ne.s32.totalorder %s106, %s107
      %p119 = scmp.eq.s32.totalorder %s20, 1
      %p120 = por %p118, %p119
      %p122 = scmp.ne.s32.totalorder %s107, %s121
      %p123 = scmp.eq.s32.totalorder %s20, 0
      %p124 = por %p122, %p123
      %s126 = sadd.s32 %s125, 1
      %p129 = scmp.eq.s32.totalorder %s14, 1
      %p130 = scmp.ne.s32.totalorder %s125, %s127
      %p131 = scmp.eq.s32.totalorder %s14, 0
      %p132 = por %p130, %p131
      %p133 = scmp.ne.s32.totalorder %s125, %s127
      %p134 = scmp.eq.s32.totalorder %s19, 1
      %p135 = por %p133, %p134
      %p136 = scmp.ne.s32.totalorder %s127, %s128
      %p137 = scmp.eq.s32.totalorder %s19, 0
      %p138 = por %p136, %p137
      %p139 = scmp.ne.s32.totalorder %s127, %s128
      %p140 = scmp.eq.s32.totalorder %s20, 1
      %p141 = por %p139, %p140
      %p143 = scmp.ne.s32.totalorder %s128, %s142
      %p144 = scmp.eq.s32.totalorder %s20, 0
      %p145 = por %p143, %p144
      %s146 = ssub.s32 %s21, %s33
      %p147 = scmp.eq.s32.totalorder %s146, 0
      %s149 = sadd.s32 %s148, 1
      %s150 = scalar_select %p147, %s148, %s149
      %p153 = pneg %p147
      %p154 = scmp.eq.s32.totalorder %s14, 1
      %p155 = por %p153, %p154
      %p156 = scmp.ne.s32.totalorder %s148, %s151
      %p157 = scmp.eq.s32.totalorder %s14, 0
      %p158 = por %p156, %p157
      %p159 = scmp.ne.s32.totalorder %s148, %s151
      %p160 = scmp.eq.s32.totalorder %s19, 1
      %p161 = por %p159, %p160
      %p162 = scmp.ne.s32.totalorder %s151, %s152
      %p163 = scmp.eq.s32.totalorder %s19, 0
      %p164 = por %p162, %p163
      %p165 = scmp.ne.s32.totalorder %s151, %s152
      %p166 = scmp.eq.s32.totalorder %s20, 1
      %p167 = por %p165, %p166
      %p169 = scmp.ne.s32.totalorder %s152, %s168
      %p170 = scmp.eq.s32.totalorder %s20, 0
      %p171 = por %p169, %p170
      %p172 = scmp.le.s32.totalorder 1, %s14
      %p173 = scmp.lt.s32.totalorder %s14, 3
      %p174 = pnand %p172, %p173
      %p175 = pneg %p174
      // Predicated region
      $region9: #{tpu_custom_call.1} parent=5 // pred_check
        _
      $region10: #{tpu_custom_call.1} parent=5 // pred_check_branch
        %177 = sbr.rel (%p174) target = $region12
      $region11: #{tpu_custom_call.1} parent=5 // pred_region
        %s178 = ssub.s32 %s14, 1
        // Predicated region
        $region13: #{tpu_custom_call.1} parent=11 // pred_check
          %p179 = pneg %p75
        $region14: #{tpu_custom_call.1} parent=11 // pred_check_branch
          %181 = sbr.rel (%p179) target = $region16
        $region15: #{tpu_custom_call.1} parent=11 // pred_region
          %s183 = ssub.s32 1536, 1536
          %184 = vsyncadd [#allocation5], %s183
          %s185 = sshll.u32 [#allocation4], 4
          %s186 = int_to_ptr.vmem [resolvable:$true] %s185
          %191 = dma.hbm_to_vmem [thread:$0]  %s1, 1536, %s186, [#allocation5], 768, 768, 48
        $region16: #{tpu_custom_call.1} parent=11 // pred_fallthru
          _
        // Predicated region
        $region17: #{tpu_custom_call.1} parent=11 // pred_check
          %p192 = pneg %p96
        $region18: #{tpu_custom_call.1} parent=11 // pred_check_branch
          %194 = sbr.rel (%p192) target = $region20
        $region19: #{tpu_custom_call.1} parent=11 // pred_region
          _
        $region20: #{tpu_custom_call.1} parent=11 // pred_fallthru
          _
        // Predicated region
        $region21: #{tpu_custom_call.1} parent=11 // pred_check
          %p195 = pneg %p117
        $region22: #{tpu_custom_call.1} parent=11 // pred_check_branch
          %197 = sbr.rel (%p195) target = $region24
        $region23: #{tpu_custom_call.1} parent=11 // pred_region
          _
        $region24: #{tpu_custom_call.1} parent=11 // pred_fallthru
          _
        // Predicated region
        $region25: #{tpu_custom_call.1} parent=11 // pred_check
          %p198 = pneg %p138
        $region26: #{tpu_custom_call.1} parent=11 // pred_check_branch
          %200 = sbr.rel (%p198) target = $region28
        $region27: #{tpu_custom_call.1} parent=11 // pred_region
          _
        $region28: #{tpu_custom_call.1} parent=11 // pred_fallthru
          _
      $region12: #{tpu_custom_call.1} parent=5 // pred_fallthru
        _
      %p201 = scmp.lt.s32.totalorder %s14, 2
      // Predicated region
      $region29: #{tpu_custom_call.1} parent=5 // pred_check
        %p202 = pneg %p201
      $region30: #{tpu_custom_call.1} parent=5 // pred_check_branch
        %204 = sbr.rel (%p202) target = $region32
      $region31: #{tpu_custom_call.1} parent=5 // pred_region
        // Predicated region
        $region33: #{tpu_custom_call.1} parent=31 // pred_check
          %p205 = pneg %p48
        $region34: #{tpu_custom_call.1} parent=31 // pred_check_branch
          %207 = sbr.rel (%p205) target = $region36
        $region35: #{tpu_custom_call.1} parent=31 // pred_region
          %s208 = smul.u32 8, %s22
          %p209 = scmp.lt.s32.totalorder %s21, 1
          %s210 = scalar_select %p209, %s21, 1
          %p211 = scmp.lt.s32.totalorder %s208, 7
          %s212 = scalar_select %p211, %s208, 7
          %s213 = smul.addr %s210, 8
          %s214 = sadd.s32 %s212, %s213
          %s215 = smul.addr %s214, 4
          %s216 = scalar_lea.vmem %s0, %s215
          %s217 = smul.u32 8, %s22
        $region36: #{tpu_custom_call.1} parent=31 // pred_fallthru
          _
      $region32: #{tpu_custom_call.1} parent=5 // pred_fallthru
        _
      %p218 = scmp.le.s32.totalorder 1, %s14
      %p219 = scmp.lt.s32.totalorder %s14, 3
      %p220 = pnand %p218, %p219
      %p221 = pneg %p220
      // Predicated region
      $region37: #{tpu_custom_call.1} parent=5 // pred_check
        _
      $region38: #{tpu_custom_call.1} parent=5 // pred_check_branch
        %223 = sbr.rel (%p220) target = $region40
      $region39: #{tpu_custom_call.1} parent=5 // pred_region
        %s224 = ssub.s32 %s14, 1
        // Predicated region
        $region41: #{tpu_custom_call.1} parent=39 // pred_check
          %p225 = pneg %p75
        $region42: #{tpu_custom_call.1} parent=39 // pred_check_branch
          %227 = sbr.rel (%p225) target = $region44
        $region43: #{tpu_custom_call.1} parent=39 // pred_region
          %228 = dma.done [#allocation5], 1536
        $region44: #{tpu_custom_call.1} parent=39 // pred_fallthru
          _
        %s229 = smul.u32 8, %s24
        %p230 = scmp.lt.s32.totalorder %s23, 1
        %s231 = scalar_select %p230, %s23, 1
        %p232 = scmp.lt.s32.totalorder %s229, 7
        %s233 = scalar_select %p232, %s229, 7
        %s234 = smul.addr %s231, 8
        %s235 = sadd.s32 %s233, %s234
        %s236 = smul.addr %s235, 4
        %s237 = scalar_lea.vmem %s0, %s236
        %p238 = pneg %p54
        %p239 = pneg %p51
        %p240 = pneg %p75
        %p241 = pneg %p72
        %p242 = pneg %p96
        %p243 = pneg %p93
        %p244 = pneg %p117
        %p245 = pneg %p114
        %p246 = pneg %p138
        %p247 = pneg %p135
        %p248 = pneg %p164
        %p249 = pneg %p161
        %p250 = scmp.lt.s32.totalorder %s23, 1
        %s251 = scalar_select %p250, %s23, 1
        %s252 = scalar_lea.vmem %s5, %s251
        %s253 = smul.u32 8, %s24
        %p254 = scmp.lt.s32.totalorder %s23, 1
        %s255 = scalar_select %p254, %s23, 1
        %p256 = scmp.lt.s32.totalorder %s253, 7
        %s257 = scalar_select %p256, %s253, 7
        %s258 = smul.addr %s255, 8
        %s259 = sadd.s32 %s257, %s258
        %s260 = smul.addr %s259, 4
        %s261 = scalar_lea.vmem %s0, %s260
        %s262 = smul.u32 8, %s24
        %p263 = scmp.lt.s32.totalorder %s23, 1
        %s264 = scalar_select %p263, %s23, 1
        %s265 = scalar_lea.vmem %s5, %s264
        %p267 = scmp.eq.s32.totalorder %s24, 0
        // Predicated region
        $region45: #{tpu_custom_call.1} parent=39 // pred_check
          %p268 = pneg %p267
        $region46: #{tpu_custom_call.1} parent=39 // pred_check_branch
          %270 = sbr.rel (%p268) target = $region48
        $region47: #{tpu_custom_call.1} parent=39 // pred_region
          %271 = vst [vmem:[#allocation2] sm:$0xff] 0.0
          %v272 = vlaneseq
          %vm273 = vcmp.ge.s32.totalorder %v272, 0
          %vm274 = vcmp.lt.s32.totalorder %v272, 512
          %vm275 = vmand %vm273, %vm274
          %276 = vst.msk [vmem:[#allocation2 + $0x8] sm:$0xf] %vm275, 0.0
        $region48: #{tpu_custom_call.1} parent=39 // pred_fallthru
          _
        %v277 = vld [vmem:[%s261] sm:$0xf]
        %v278 = vld [vmem:[%s261 + $0x4] sm:$0xf]
        %v279 = vld [vmem:[%s261 + $0x8] sm:$0xf]
        %v280 = vld [vmem:[%s261 + $0xc] sm:$0xf]
        %v281 = vld [vmem:[%s261 + $0x10] sm:$0xf]
        %v282 = vld [vmem:[%s261 + $0x14] sm:$0xf]
        %v283 = vld [vmem:[%s261 + $0x18] sm:$0xf]
        %v284 = vld [vmem:[%s261 + $0x1c] sm:$0xf]
        %v285 = vld [vmem:[#allocation4] sm:$0xff]
        %v286 = vld [vmem:[#allocation4 + $0x8] sm:$0xff]
        %v287 = vld [vmem:[#allocation4 + $0x10] sm:$0xff]
        %v288 = vld [vmem:[#allocation4 + $0x18] sm:$0xff]
        %v289 = vld [vmem:[#allocation4 + $0x20] sm:$0xff]
        %v290 = vld [vmem:[#allocation4 + $0x28] sm:$0xff]
        %v291 = vld [vmem:[#allocation4 + $0x30] sm:$0x33]
        %v292 = vld [vmem:[#allocation4 + $0x38] sm:$0x33]
        %v293 = vld [vmem:[#allocation4 + $0x40] sm:$0x33]
        %v294 = vld [vmem:[#allocation4 + $0x48] sm:$0x33]
        %v295 = vld [vmem:[#allocation4 + $0x50] sm:$0x33]
        %v296 = vld [vmem:[#allocation4 + $0x58] sm:$0x33]
        %v297 = vld [vmem:[%s2] sm:$0xff]
        %v298 = vld [vmem:[%s2 + $0x8] sm:$0xf]
        %v301 = vlaneseq
        %v302 = vshrl.u32 %v301, 7
        %v303 = vsub.s32 0, %v302
        %v304 = vrot.slane %v297, %v303
        %v305 = vlaneseq
        %v306 = vshrl.u32 %v305, 7
        %v307 = vsub.s32 1, %v306
        %v308 = vrot.slane %v297, %v307
        %v309 = vlaneseq
        %v310 = vshrl.u32 %v309, 7
        %v311 = vsub.s32 2, %v310
        %v312 = vrot.slane %v297, %v311
        %v313 = vlaneseq
        %v314 = vshrl.u32 %v313, 7
        %v315 = vsub.s32 3, %v314
        %v316 = vrot.slane %v297, %v315
        %v317 = vlaneseq
        %v318 = vshrl.u32 %v317, 7
        %v319 = vsub.s32 4, %v318
        %v320 = vrot.slane %v297, %v319
        %v321 = vlaneseq
        %v322 = vshrl.u32 %v321, 7
        %v323 = vsub.s32 5, %v322
        %v324 = vrot.slane %v297, %v323
        %v325 = vlaneseq
        %v326 = vshrl.u32 %v325, 7
        %v327 = vsub.s32 6, %v326
        %v328 = vrot.slane %v297, %v327
        %v329 = vlaneseq
        %v330 = vshrl.u32 %v329, 7
        %v331 = vsub.s32 7, %v330
        %v332 = vrot.slane %v297, %v331
        %v333 = vlaneseq
        %v334 = vshrl.u32 %v333, 7
        %v335 = vsub.s32 0, %v334
        %v336 = vrot.slane %v298, %v335
        %v337 = vlaneseq
        %v338 = vshrl.u32 %v337, 7
        %v339 = vsub.s32 1, %v338
        %v340 = vrot.slane %v298, %v339
        %v341 = vlaneseq
        %v342 = vshrl.u32 %v341, 7
        %v343 = vsub.s32 2, %v342
        %v344 = vrot.slane %v298, %v343
        %v345 = vlaneseq
        %v346 = vshrl.u32 %v345, 7
        %v347 = vsub.s32 3, %v346
        %v348 = vrot.slane %v298, %v347
        %v369 = vunpack.c.l.b16 %v277
        %v370 = vunpack.c.l.b16 %v278
        %v371 = vunpack.c.l.b16 %v279
        %v372 = vunpack.c.l.b16 %v280
        %v373 = vunpack.c.l.b16 %v281
        %v374 = vunpack.c.l.b16 %v282
        %v375 = vunpack.c.l.b16 %v283
        %v376 = vunpack.c.l.b16 %v284
        %v377 = vpack.c.b16 %v370, %v369
        %v378 = vpack.c.b16 %v372, %v371
        %v379 = vpack.c.b16 %v374, %v373
        %v380 = vpack.c.b16 %v376, %v375
        %v393 = vunpack.c.l.b16 %v285
        %v394 = vunpack.c.h.b16 %v285
        %v395 = vunpack.c.l.b16 %v286
        %v396 = vunpack.c.h.b16 %v286
        %v397 = vunpack.c.l.b16 %v287
        %v398 = vunpack.c.h.b16 %v287
        %v399 = vunpack.c.l.b16 %v288
        %v400 = vunpack.c.h.b16 %v288
        %v401 = vunpack.c.l.b16 %v289
        %v402 = vunpack.c.h.b16 %v289
        %v403 = vunpack.c.l.b16 %v290
        %v404 = vunpack.c.h.b16 %v290
        %v405 = vunpack.c.l.b16 %v291
        %v406 = vunpack.c.h.b16 %v291
        %v407 = vunpack.c.l.b16 %v292
        %v408 = vunpack.c.h.b16 %v292
        %v409 = vunpack.c.l.b16 %v293
        %v410 = vunpack.c.h.b16 %v293
        %v411 = vunpack.c.l.b16 %v294
        %v412 = vunpack.c.h.b16 %v294
        %v413 = vunpack.c.l.b16 %v295
        %v414 = vunpack.c.h.b16 %v295
        %v415 = vunpack.c.l.b16 %v296
        %v416 = vunpack.c.h.b16 %v296
        %v417 = vpack.c.b16 %v405, %v393
        %v418 = vpack.c.b16 %v406, %v394
        %v419 = vpack.c.b16 %v407, %v395
        %v420 = vpack.c.b16 %v408, %v396
        %v421 = vpack.c.b16 %v409, %v397
        %v422 = vpack.c.b16 %v410, %v398
        %v423 = vpack.c.b16 %v411, %v399
        %v424 = vpack.c.b16 %v412, %v400
        %v425 = vpack.c.b16 %v413, %v401
        %v426 = vpack.c.b16 %v414, %v402
        %v427 = vpack.c.b16 %v415, %v403
        %v428 = vpack.c.b16 %v416, %v404
        %vm429 = vcmask 97280
        %v431 = vsel %vm429, %v377, 0
        %v434 = vsel %vm429, %v378, 0
        %v437 = vsel %vm429, %v379, 0
        %v440 = vsel %vm429, %v380, 0
        %vm442 = vcmask 1045504
        %v444 = vsel %vm442, %v417, 0
        %v447 = vsel %vm442, %v418, 0
        %v450 = vsel %vm442, %v419, 0
        %v453 = vsel %vm442, %v420, 0
        %v456 = vsel %vm442, %v421, 0
        %v459 = vsel %vm442, %v422, 0
        %v462 = vsel %vm442, %v423, 0
        %v465 = vsel %vm442, %v424, 0
        %v468 = vsel %vm442, %v425, 0
        %v471 = vsel %vm442, %v426, 0
        %v474 = vsel %vm442, %v427, 0
        %v477 = vsel %vm442, %v428, 0
        %479 = vmatprep.subr.bf16.mxu0 %v447
        %480 = vmatpush1.bf16.msra.mxu0 %v444
        %481 = vmatprep.subr.bf16.mxu0 0
        %482 = vmatpush1.bf16.msra.mxu0 0
        %483 = vmatprep.subr.bf16.mxu0 0
        %484 = vmatpush1.bf16.msra.mxu0 0
        %485 = vmatprep.subr.bf16.mxu0 0
        %486 = vmatpush1.bf16.msra.mxu0 0
        %487 = vmatprep.subr.bf16.mxu0 0
        %488 = vmatpush1.bf16.msra.mxu0 0
        %489 = vmatprep.subr.bf16.mxu0 0
        %490 = vmatpush1.bf16.msra.mxu0 0
        %491 = vmatprep.subr.bf16.mxu0 0
        %492 = vmatpush1.bf16.msra.mxu0 0
        %493 = vmatprep.subr.bf16.mxu0 0
        %494 = vmatpush1.bf16.msra.mxu0 0
        %495 = vmatprep.subr.bf16.mxu0 0
        %496 = vmatpush1.bf16.msra.mxu0 0
        %497 = vmatprep.subr.bf16.mxu0 0
        %498 = vmatpush1.bf16.msra.mxu0 0
        %499 = vmatprep.subr.bf16.mxu0 0
        %500 = vmatpush1.bf16.msra.mxu0 0
        %501 = vmatprep.subr.bf16.mxu0 0
        %502 = vmatpush1.bf16.msra.mxu0 0
        %503 = vmatprep.subr.bf16.mxu0 0
        %504 = vmatpush1.bf16.msra.mxu0 0
        %505 = vmatprep.subr.bf16.mxu0 0
        %506 = vmatpush1.bf16.msra.mxu0 0
        %507 = vmatprep.subr.bf16.mxu0 0
        %508 = vmatpush1.bf16.msra.mxu0 0
        %509 = vmatprep.subr.bf16.mxu0 0
        %510 = vmatpush1.bf16.msra.mxu0 0
        %511 = vmatprep.mubr.bf16.mxu0 0
        %512 = vmatmul.mubr.bf16.gmra.mrb[0].mxu0 %v431
        %v513 = vpop.f32.mrb[0].mxu0
        %v514 = vadd.f32 %v304, %v513
        %v515 = vpop.f32.mrb[0].mxu0
        %v516 = vadd.f32 %v308, %v515
        %v517 = vpop.f32.mrb[0].mxu0
        %v518 = vadd.f32 %v304, %v517
        %v519 = vpop.f32.mrb[0].mxu0
        %v520 = vadd.f32 %v308, %v519
        %521 = vmatprep.mubr.bf16.mxu0 0
        %522 = vmatmul.mubr.bf16.gmra.mrb[0].mxu0 %v434
        %v523 = vpop.f32.mrb[0].mxu0
        %v524 = vadd.f32 %v304, %v523
        %v525 = vpop.f32.mrb[0].mxu0
        %v526 = vadd.f32 %v308, %v525
        %v527 = vpop.f32.mrb[0].mxu0
        %v528 = vadd.f32 %v304, %v527
        %v529 = vpop.f32.mrb[0].mxu0
        %v530 = vadd.f32 %v308, %v529
        %531 = vmatprep.mubr.bf16.mxu0 0
        %532 = vmatmul.mubr.bf16.gmra.mrb[0].mxu0 %v437
        %v533 = vpop.f32.mrb[0].mxu0
        %v534 = vadd.f32 %v304, %v533
        %v535 = vpop.f32.mrb[0].mxu0
        %v536 = vadd.f32 %v308, %v535
        %v537 = vpop.f32.mrb[0].mxu0
        %v538 = vadd.f32 %v304, %v537
        %v539 = vpop.f32.mrb[0].mxu0
        %v540 = vadd.f32 %v308, %v539
        %541 = vmatprep.mubr.bf16.mxu0 0
        %542 = vmatmul.mubr.bf16.gmra.mrb[0].mxu0 %v440
        %v543 = vpop.f32.mrb[0].mxu0
        %v544 = vadd.f32 %v304, %v543
        %v545 = vpop.f32.mrb[0].mxu0
        %v546 = vadd.f32 %v308, %v545
        %v547 = vpop.f32.mrb[0].mxu0
        %v548 = vadd.f32 %v304, %v547
        %v549 = vpop.f32.mrb[0].mxu0
        %v550 = vadd.f32 %v308, %v549
        %551 = vdwg.mxu0
        %552 = vmatprep.subr.bf16.mxu0 %v453
        %553 = vmatpush1.bf16.msra.mxu0 %v450
        %554 = vmatprep.subr.bf16.mxu0 0
        %555 = vmatpush1.bf16.msra.mxu0 0
        %556 = vmatprep.subr.bf16.mxu0 0
        %557 = vmatpush1.bf16.msra.mxu0 0
        %558 = vmatprep.subr.bf16.mxu0 0
        %559 = vmatpush1.bf16.msra.mxu0 0
        %560 = vmatprep.subr.bf16.mxu0 0
        %561 = vmatpush1.bf16.msra.mxu0 0
        %562 = vmatprep.subr.bf16.mxu0 0
        %563 = vmatpush1.bf16.msra.mxu0 0
        %564 = vmatprep.subr.bf16.mxu0 0
        %565 = vmatpush1.bf16.msra.mxu0 0
        %566 = vmatprep.subr.bf16.mxu0 0
        %567 = vmatpush1.bf16.msra.mxu0 0
        %568 = vmatprep.subr.bf16.mxu0 0
        %569 = vmatpush1.bf16.msra.mxu0 0
        %570 = vmatprep.subr.bf16.mxu0 0
        %571 = vmatpush1.bf16.msra.mxu0 0
        %572 = vmatprep.subr.bf16.mxu0 0
        %573 = vmatpush1.bf16.msra.mxu0 0
        %574 = vmatprep.subr.bf16.mxu0 0
        %575 = vmatpush1.bf16.msra.mxu0 0
        %576 = vmatprep.subr.bf16.mxu0 0
        %577 = vmatpush1.bf16.msra.mxu0 0
        %578 = vmatprep.subr.bf16.mxu0 0
        %579 = vmatpush1.bf16.msra.mxu0 0
        %580 = vmatprep.subr.bf16.mxu0 0
        %581 = vmatpush1.bf16.msra.mxu0 0
        %582 = vmatprep.subr.bf16.mxu0 0
        %583 = vmatpush1.bf16.msra.mxu0 0
        %584 = vmatprep.mubr.bf16.mxu0 0
        %585 = vmatmul.mubr.bf16.gmra.mrb[0].mxu0 %v431
        %v586 = vpop.f32.mrb[0].mxu0
        %v587 = vadd.f32 %v312, %v586
        %v588 = vpop.f32.mrb[0].mxu0
        %v589 = vadd.f32 %v316, %v588
        %v590 = vpop.f32.mrb[0].mxu0
        %v591 = vadd.f32 %v312, %v590
        %v592 = vpop.f32.mrb[0].mxu0
        %v593 = vadd.f32 %v316, %v592
        %594 = vmatprep.mubr.bf16.mxu0 0
        %595 = vmatmul.mubr.bf16.gmra.mrb[0].mxu0 %v434
        %v596 = vpop.f32.mrb[0].mxu0
        %v597 = vadd.f32 %v312, %v596
        %v598 = vpop.f32.mrb[0].mxu0
        %v599 = vadd.f32 %v316, %v598
        %v600 = vpop.f32.mrb[0].mxu0
        %v601 = vadd.f32 %v312, %v600
        %v602 = vpop.f32.mrb[0].mxu0
        %v603 = vadd.f32 %v316, %v602
        %604 = vmatprep.mubr.bf16.mxu0 0
        %605 = vmatmul.mubr.bf16.gmra.mrb[0].mxu0 %v437
        %v606 = vpop.f32.mrb[0].mxu0
        %v607 = vadd.f32 %v312, %v606
        %v608 = vpop.f32.mrb[0].mxu0
        %v609 = vadd.f32 %v316, %v608
        %v610 = vpop.f32.mrb[0].mxu0
        %v611 = vadd.f32 %v312, %v610
        %v612 = vpop.f32.mrb[0].mxu0
        %v613 = vadd.f32 %v316, %v612
        %614 = vmatprep.mubr.bf16.mxu0 0
        %615 = vmatmul.mubr.bf16.gmra.mrb[0].mxu0 %v440
        %v616 = vpop.f32.mrb[0].mxu0
        %v617 = vadd.f32 %v312, %v616
        %v618 = vpop.f32.mrb[0].mxu0
        %v619 = vadd.f32 %v316, %v618
        %v620 = vpop.f32.mrb[0].mxu0
        %v621 = vadd.f32 %v312, %v620
        %v622 = vpop.f32.mrb[0].mxu0
        %v623 = vadd.f32 %v316, %v622
        %624 = vdwg.mxu0
        %625 = vmatprep.subr.bf16.mxu0 %v459
        %626 = vmatpush1.bf16.msra.mxu0 %v456
        %627 = vmatprep.subr.bf16.mxu0 0
        %628 = vmatpush1.bf16.msra.mxu0 0
        %629 = vmatprep.subr.bf16.mxu0 0
        %630 = vmatpush1.bf16.msra.mxu0 0
        %631 = vmatprep.subr.bf16.mxu0 0
        %632 = vmatpush1.bf16.msra.mxu0 0
        %633 = vmatprep.subr.bf16.mxu0 0
        %634 = vmatpush1.bf16.msra.mxu0 0
        %635 = vmatprep.subr.bf16.mxu0 0
        %636 = vmatpush1.bf16.msra.mxu0 0
        %637 = vmatprep.subr.bf16.mxu0 0
        %638 = vmatpush1.bf16.msra.mxu0 0
        %639 = vmatprep.subr.bf16.mxu0 0
        %640 = vmatpush1.bf16.msra.mxu0 0
        %641 = vmatprep.subr.bf16.mxu0 0
        %642 = vmatpush1.bf16.msra.mxu0 0
        %643 = vmatprep.subr.bf16.mxu0 0
        %644 = vmatpush1.bf16.msra.mxu0 0
        %645 = vmatprep.subr.bf16.mxu0 0
        %646 = vmatpush1.bf16.msra.mxu0 0
        %647 = vmatprep.subr.bf16.mxu0 0
        %648 = vmatpush1.bf16.msra.mxu0 0
        %649 = vmatprep.subr.bf16.mxu0 0
        %650 = vmatpush1.bf16.msra.mxu0 0
        %651 = vmatprep.subr.bf16.mxu0 0
        %652 = vmatpush1.bf16.msra.mxu0 0
        %653 = vmatprep.subr.bf16.mxu0 0
        %654 = vmatpush1.bf16.msra.mxu0 0
        %655 = vmatprep.subr.bf16.mxu0 0
        %656 = vmatpush1.bf16.msra.mxu0 0
        %657 = vmatprep.mubr.bf16.mxu0 0
        %658 = vmatmul.mubr.bf16.gmra.mrb[0].mxu0 %v431
        %v659 = vpop.f32.mrb[0].mxu0
        %v660 = vadd.f32 %v320, %v659
        %v661 = vpop.f32.mrb[0].mxu0
        %v662 = vadd.f32 %v324, %v661
        %v663 = vpop.f32.mrb[0].mxu0
        %v664 = vadd.f32 %v320, %v663
        %v665 = vpop.f32.mrb[0].mxu0
        %v666 = vadd.f32 %v324, %v665
        %667 = vmatprep.mubr.bf16.mxu0 0
        %668 = vmatmul.mubr.bf16.gmra.mrb[0].mxu0 %v434
        %v669 = vpop.f32.mrb[0].mxu0
        %v670 = vadd.f32 %v320, %v669
        %v671 = vpop.f32.mrb[0].mxu0
        %v672 = vadd.f32 %v324, %v671
        %v673 = vpop.f32.mrb[0].mxu0
        %v674 = vadd.f32 %v320, %v673
        %v675 = vpop.f32.mrb[0].mxu0
        %v676 = vadd.f32 %v324, %v675
        %677 = vmatprep.mubr.bf16.mxu0 0
        %678 = vmatmul.mubr.bf16.gmra.mrb[0].mxu0 %v437
        %v679 = vpop.f32.mrb[0].mxu0
        %v680 = vadd.f32 %v320, %v679
        %v681 = vpop.f32.mrb[0].mxu0
        %v682 = vadd.f32 %v324, %v681
        %v683 = vpop.f32.mrb[0].mxu0
        %v684 = vadd.f32 %v320, %v683
        %v685 = vpop.f32.mrb[0].mxu0
        %v686 = vadd.f32 %v324, %v685
        %687 = vmatprep.mubr.bf16.mxu0 0
        %688 = vmatmul.mubr.bf16.gmra.mrb[0].mxu0 %v440
        %v689 = vpop.f32.mrb[0].mxu0
        %v690 = vadd.f32 %v320, %v689
        %v691 = vpop.f32.mrb[0].mxu0
        %v692 = vadd.f32 %v324, %v691
        %v693 = vpop.f32.mrb[0].mxu0
        %v694 = vadd.f32 %v320, %v693
        %v695 = vpop.f32.mrb[0].mxu0
        %v696 = vadd.f32 %v324, %v695
        %697 = vdwg.mxu0
        %698 = vmatprep.subr.bf16.mxu0 %v465
        %699 = vmatpush1.bf16.msra.mxu0 %v462
        %700 = vmatprep.subr.bf16.mxu0 0
        %701 = vmatpush1.bf16.msra.mxu0 0
        %702 = vmatprep.subr.bf16.mxu0 0
        %703 = vmatpush1.bf16.msra.mxu0 0
        %704 = vmatprep.subr.bf16.mxu0 0
        %705 = vmatpush1.bf16.msra.mxu0 0
        %706 = vmatprep.subr.bf16.mxu0 0
        %707 = vmatpush1.bf16.msra.mxu0 0
        %708 = vmatprep.subr.bf16.mxu0 0
        %709 = vmatpush1.bf16.msra.mxu0 0
        %710 = vmatprep.subr.bf16.mxu0 0
        %711 = vmatpush1.bf16.msra.mxu0 0
        %712 = vmatprep.subr.bf16.mxu0 0
        %713 = vmatpush1.bf16.msra.mxu0 0
        %714 = vmatprep.subr.bf16.mxu0 0
        %715 = vmatpush1.bf16.msra.mxu0 0
        %716 = vmatprep.subr.bf16.mxu0 0
        %717 = vmatpush1.bf16.msra.mxu0 0
        %718 = vmatprep.subr.bf16.mxu0 0
        %719 = vmatpush1.bf16.msra.mxu0 0
        %720 = vmatprep.subr.bf16.mxu0 0
        %721 = vmatpush1.bf16.msra.mxu0 0
        %722 = vmatprep.subr.bf16.mxu0 0
        %723 = vmatpush1.bf16.msra.mxu0 0
        %724 = vmatprep.subr.bf16.mxu0 0
        %725 = vmatpush1.bf16.msra.mxu0 0
        %726 = vmatprep.subr.bf16.mxu0 0
        %727 = vmatpush1.bf16.msra.mxu0 0
        %728 = vmatprep.subr.bf16.mxu0 0
        %729 = vmatpush1.bf16.msra.mxu0 0
        %730 = vmatprep.mubr.bf16.mxu0 0
        %731 = vmatmul.mubr.bf16.gmra.mrb[0].mxu0 %v431
        %v732 = vpop.f32.mrb[0].mxu0
        %v733 = vadd.f32 %v328, %v732
        %v734 = vpop.f32.mrb[0].mxu0
        %v735 = vadd.f32 %v332, %v734
        %v736 = vpop.f32.mrb[0].mxu0
        %v737 = vadd.f32 %v328, %v736
        %v738 = vpop.f32.mrb[0].mxu0
        %v739 = vadd.f32 %v332, %v738
        %740 = vmatprep.mubr.bf16.mxu0 0
        %741 = vmatmul.mubr.bf16.gmra.mrb[0].mxu0 %v434
        %v742 = vpop.f32.mrb[0].mxu0
        %v743 = vadd.f32 %v328, %v742
        %v744 = vpop.f32.mrb[0].mxu0
        %v745 = vadd.f32 %v332, %v744
        %v746 = vpop.f32.mrb[0].mxu0
        %v747 = vadd.f32 %v328, %v746
        %v748 = vpop.f32.mrb[0].mxu0
        %v749 = vadd.f32 %v332, %v748
        %750 = vmatprep.mubr.bf16.mxu0 0
        %751 = vmatmul.mubr.bf16.gmra.mrb[0].mxu0 %v437
        %v752 = vpop.f32.mrb[0].mxu0
        %v753 = vadd.f32 %v328, %v752
        %v754 = vpop.f32.mrb[0].mxu0
        %v755 = vadd.f32 %v332, %v754
        %v756 = vpop.f32.mrb[0].mxu0
        %v757 = vadd.f32 %v328, %v756
        %v758 = vpop.f32.mrb[0].mxu0
        %v759 = vadd.f32 %v332, %v758
        %760 = vmatprep.mubr.bf16.mxu0 0
        %761 = vmatmul.mubr.bf16.gmra.mrb[0].mxu0 %v440
        %v762 = vpop.f32.mrb[0].mxu0
        %v763 = vadd.f32 %v328, %v762
        %v764 = vpop.f32.mrb[0].mxu0
        %v765 = vadd.f32 %v332, %v764
        %v766 = vpop.f32.mrb[0].mxu0
        %v767 = vadd.f32 %v328, %v766
        %v768 = vpop.f32.mrb[0].mxu0
        %v769 = vadd.f32 %v332, %v768
        %770 = vdwg.mxu0
        %771 = vmatprep.subr.bf16.mxu0 %v471
        %772 = vmatpush1.bf16.msra.mxu0 %v468
        %773 = vmatprep.subr.bf16.mxu0 0
        %774 = vmatpush1.bf16.msra.mxu0 0
        %775 = vmatprep.subr.bf16.mxu0 0
        %776 = vmatpush1.bf16.msra.mxu0 0
        %777 = vmatprep.subr.bf16.mxu0 0
        %778 = vmatpush1.bf16.msra.mxu0 0
        %779 = vmatprep.subr.bf16.mxu0 0
        %780 = vmatpush1.bf16.msra.mxu0 0
        %781 = vmatprep.subr.bf16.mxu0 0
        %782 = vmatpush1.bf16.msra.mxu0 0
        %783 = vmatprep.subr.bf16.mxu0 0
        %784 = vmatpush1.bf16.msra.mxu0 0
        %785 = vmatprep.subr.bf16.mxu0 0
        %786 = vmatpush1.bf16.msra.mxu0 0
        %787 = vmatprep.subr.bf16.mxu0 0
        %788 = vmatpush1.bf16.msra.mxu0 0
        %789 = vmatprep.subr.bf16.mxu0 0
        %790 = vmatpush1.bf16.msra.mxu0 0
        %791 = vmatprep.subr.bf16.mxu0 0
        %792 = vmatpush1.bf16.msra.mxu0 0
        %793 = vmatprep.subr.bf16.mxu0 0
        %794 = vmatpush1.bf16.msra.mxu0 0
        %795 = vmatprep.subr.bf16.mxu0 0
        %796 = vmatpush1.bf16.msra.mxu0 0
        %797 = vmatprep.subr.bf16.mxu0 0
        %798 = vmatpush1.bf16.msra.mxu0 0
        %799 = vmatprep.subr.bf16.mxu0 0
        %800 = vmatpush1.bf16.msra.mxu0 0
        %801 = vmatprep.subr.bf16.mxu0 0
        %802 = vmatpush1.bf16.msra.mxu0 0
        %803 = vmatprep.mubr.bf16.mxu0 0
        %804 = vmatmul.mubr.bf16.gmra.mrb[0].mxu0 %v431
        %v805 = vpop.f32.mrb[0].mxu0
        %v806 = vadd.f32 %v336, %v805
        %v807 = vpop.f32.mrb[0].mxu0
        %v808 = vadd.f32 %v340, %v807
        %v809 = vpop.f32.mrb[0].mxu0
        %v810 = vadd.f32 %v336, %v809
        %v811 = vpop.f32.mrb[0].mxu0
        %v812 = vadd.f32 %v340, %v811
        %813 = vmatprep.mubr.bf16.mxu0 0
        %814 = vmatmul.mubr.bf16.gmra.mrb[0].mxu0 %v434
        %v815 = vpop.f32.mrb[0].mxu0
        %v816 = vadd.f32 %v336, %v815
        %v817 = vpop.f32.mrb[0].mxu0
        %v818 = vadd.f32 %v340, %v817
        %v819 = vpop.f32.mrb[0].mxu0
        %v820 = vadd.f32 %v336, %v819
        %v821 = vpop.f32.mrb[0].mxu0
        %v822 = vadd.f32 %v340, %v821
        %823 = vmatprep.mubr.bf16.mxu0 0
        %824 = vmatmul.mubr.bf16.gmra.mrb[0].mxu0 %v437
        %v825 = vpop.f32.mrb[0].mxu0
        %v826 = vadd.f32 %v336, %v825
        %v827 = vpop.f32.mrb[0].mxu0
        %v828 = vadd.f32 %v340, %v827
        %v829 = vpop.f32.mrb[0].mxu0
        %v830 = vadd.f32 %v336, %v829
        %v831 = vpop.f32.mrb[0].mxu0
        %v832 = vadd.f32 %v340, %v831
        %833 = vmatprep.mubr.bf16.mxu0 0
        %834 = vmatmul.mubr.bf16.gmra.mrb[0].mxu0 %v440
        %v835 = vpop.f32.mrb[0].mxu0
        %v836 = vadd.f32 %v336, %v835
        %v837 = vpop.f32.mrb[0].mxu0
        %v838 = vadd.f32 %v340, %v837
        %v839 = vpop.f32.mrb[0].mxu0
        %v840 = vadd.f32 %v336, %v839
        %v841 = vpop.f32.mrb[0].mxu0
        %v842 = vadd.f32 %v340, %v841
        %843 = vdwg.mxu0
        %844 = vmatprep.subr.bf16.mxu0 %v477
        %845 = vmatpush1.bf16.msra.mxu0 %v474
        %846 = vmatprep.subr.bf16.mxu0 0
        %847 = vmatpush1.bf16.msra.mxu0 0
        %848 = vmatprep.subr.bf16.mxu0 0
        %849 = vmatpush1.bf16.msra.mxu0 0
        %850 = vmatprep.subr.bf16.mxu0 0
        %851 = vmatpush1.bf16.msra.mxu0 0
        %852 = vmatprep.subr.bf16.mxu0 0
        %853 = vmatpush1.bf16.msra.mxu0 0
        %854 = vmatprep.subr.bf16.mxu0 0
        %855 = vmatpush1.bf16.msra.mxu0 0
        %856 = vmatprep.subr.bf16.mxu0 0
        %857 = vmatpush1.bf16.msra.mxu0 0
        %858 = vmatprep.subr.bf16.mxu0 0
        %859 = vmatpush1.bf16.msra.mxu0 0
        %860 = vmatprep.subr.bf16.mxu0 0
        %861 = vmatpush1.bf16.msra.mxu0 0
        %862 = vmatprep.subr.bf16.mxu0 0
        %863 = vmatpush1.bf16.msra.mxu0 0
        %864 = vmatprep.subr.bf16.mxu0 0
        %865 = vmatpush1.bf16.msra.mxu0 0
        %866 = vmatprep.subr.bf16.mxu0 0
        %867 = vmatpush1.bf16.msra.mxu0 0
        %868 = vmatprep.subr.bf16.mxu0 0
        %869 = vmatpush1.bf16.msra.mxu0 0
        %870 = vmatprep.subr.bf16.mxu0 0
        %871 = vmatpush1.bf16.msra.mxu0 0
        %872 = vmatprep.subr.bf16.mxu0 0
        %873 = vmatpush1.bf16.msra.mxu0 0
        %874 = vmatprep.subr.bf16.mxu0 0
        %875 = vmatpush1.bf16.msra.mxu0 0
        %876 = vmatprep.mubr.bf16.mxu0 0
        %877 = vmatmul.mubr.bf16.gmra.mrb[0].mxu0 %v431
        %v878 = vpop.f32.mrb[0].mxu0
        %v879 = vadd.f32 %v344, %v878
        %v880 = vpop.f32.mrb[0].mxu0
        %v881 = vadd.f32 %v348, %v880
        %v882 = vpop.f32.mrb[0].mxu0
        %v883 = vadd.f32 %v344, %v882
        %v884 = vpop.f32.mrb[0].mxu0
        %v885 = vadd.f32 %v348, %v884
        %886 = vmatprep.mubr.bf16.mxu0 0
        %887 = vmatmul.mubr.bf16.gmra.mrb[0].mxu0 %v434
        %v888 = vpop.f32.mrb[0].mxu0
        %v889 = vadd.f32 %v344, %v888
        %v890 = vpop.f32.mrb[0].mxu0
        %v891 = vadd.f32 %v348, %v890
        %v892 = vpop.f32.mrb[0].mxu0
        %v893 = vadd.f32 %v344, %v892
        %v894 = vpop.f32.mrb[0].mxu0
        %v895 = vadd.f32 %v348, %v894
        %896 = vmatprep.mubr.bf16.mxu0 0
        %897 = vmatmul.mubr.bf16.gmra.mrb[0].mxu0 %v437
        %v898 = vpop.f32.mrb[0].mxu0
        %v899 = vadd.f32 %v344, %v898
        %v900 = vpop.f32.mrb[0].mxu0
        %v901 = vadd.f32 %v348, %v900
        %v902 = vpop.f32.mrb[0].mxu0
        %v903 = vadd.f32 %v344, %v902
        %v904 = vpop.f32.mrb[0].mxu0
        %v905 = vadd.f32 %v348, %v904
        %906 = vmatprep.mubr.bf16.mxu0 0
        %907 = vmatmul.mubr.bf16.gmra.mrb[0].mxu0 %v440
        %v908 = vpop.f32.mrb[0].mxu0
        %v909 = vadd.f32 %v344, %v908
        %v910 = vpop.f32.mrb[0].mxu0
        %v911 = vadd.f32 %v348, %v910
        %v912 = vpop.f32.mrb[0].mxu0
        %v913 = vadd.f32 %v344, %v912
        %v914 = vpop.f32.mrb[0].mxu0
        %v915 = vadd.f32 %v348, %v914
        %916 = vdwg.mxu0
        %v917 = vmul.f32 %v514, 0.5
        %v918 = vmul.f32 %v516, 0.5
        %v919 = vmul.f32 %v587, 0.5
        %v920 = vmul.f32 %v589, 0.5
        %v921 = vmul.f32 %v660, 0.5
        %v922 = vmul.f32 %v662, 0.5
        %v923 = vmul.f32 %v733, 0.5
        %v924 = vmul.f32 %v735, 0.5
        %v925 = vmul.f32 %v806, 0.5
        %v926 = vmul.f32 %v808, 0.5
        %v927 = vmul.f32 %v879, 0.5
        %v928 = vmul.f32 %v881, 0.5
        %v929 = vmul.f32 %v518, 0.5
        %v930 = vmul.f32 %v520, 0.5
        %v931 = vmul.f32 %v591, 0.5
        %v932 = vmul.f32 %v593, 0.5
        %v933 = vmul.f32 %v664, 0.5
        %v934 = vmul.f32 %v666, 0.5
        %v935 = vmul.f32 %v737, 0.5
        %v936 = vmul.f32 %v739, 0.5
        %v937 = vmul.f32 %v810, 0.5
        %v938 = vmul.f32 %v812, 0.5
        %v939 = vmul.f32 %v883, 0.5
        %v940 = vmul.f32 %v885, 0.5
        %v941 = vmul.f32 %v524, 0.5
        %v942 = vmul.f32 %v526, 0.5
        %v943 = vmul.f32 %v597, 0.5
        %v944 = vmul.f32 %v599, 0.5
        %v945 = vmul.f32 %v670, 0.5
        %v946 = vmul.f32 %v672, 0.5
        %v947 = vmul.f32 %v743, 0.5
        %v948 = vmul.f32 %v745, 0.5
        %v949 = vmul.f32 %v816, 0.5
        %v950 = vmul.f32 %v818, 0.5
        %v951 = vmul.f32 %v889, 0.5
        %v952 = vmul.f32 %v891, 0.5
        %v953 = vmul.f32 %v528, 0.5
        %v954 = vmul.f32 %v530, 0.5
        %v955 = vmul.f32 %v601, 0.5
        %v956 = vmul.f32 %v603, 0.5
        %v957 = vmul.f32 %v674, 0.5
        %v958 = vmul.f32 %v676, 0.5
        %v959 = vmul.f32 %v747, 0.5
        %v960 = vmul.f32 %v749, 0.5
        %v961 = vmul.f32 %v820, 0.5
        %v962 = vmul.f32 %v822, 0.5
        %v963 = vmul.f32 %v893, 0.5
        %v964 = vmul.f32 %v895, 0.5
        %v965 = vmul.f32 %v534, 0.5
        %v966 = vmul.f32 %v536, 0.5
        %v967 = vmul.f32 %v607, 0.5
        %v968 = vmul.f32 %v609, 0.5
        %v969 = vmul.f32 %v680, 0.5
        %v970 = vmul.f32 %v682, 0.5
        %v971 = vmul.f32 %v753, 0.5
        %v972 = vmul.f32 %v755, 0.5
        %v973 = vmul.f32 %v826, 0.5
        %v974 = vmul.f32 %v828, 0.5
        %v975 = vmul.f32 %v899, 0.5
        %v976 = vmul.f32 %v901, 0.5
        %v977 = vmul.f32 %v538, 0.5
        %v978 = vmul.f32 %v540, 0.5
        %v979 = vmul.f32 %v611, 0.5
        %v980 = vmul.f32 %v613, 0.5
        %v981 = vmul.f32 %v684, 0.5
        %v982 = vmul.f32 %v686, 0.5
        %v983 = vmul.f32 %v757, 0.5
        %v984 = vmul.f32 %v759, 0.5
        %v985 = vmul.f32 %v830, 0.5
        %v986 = vmul.f32 %v832, 0.5
        %v987 = vmul.f32 %v903, 0.5
        %v988 = vmul.f32 %v905, 0.5
        %v989 = vmul.f32 %v544, 0.5
        %v990 = vmul.f32 %v546, 0.5
        %v991 = vmul.f32 %v617, 0.5
        %v992 = vmul.f32 %v619, 0.5
        %v993 = vmul.f32 %v690, 0.5
        %v994 = vmul.f32 %v692, 0.5
        %v995 = vmul.f32 %v763, 0.5
        %v996 = vmul.f32 %v765, 0.5
        %v997 = vmul.f32 %v836, 0.5
        %v998 = vmul.f32 %v838, 0.5
        %v999 = vmul.f32 %v909, 0.5
        %v1000 = vmul.f32 %v911, 0.5
        %v1001 = vmul.f32 %v548, 0.5
        %v1002 = vmul.f32 %v550, 0.5
        %v1003 = vmul.f32 %v621, 0.5
        %v1004 = vmul.f32 %v623, 0.5
        %v1005 = vmul.f32 %v694, 0.5
        %v1006 = vmul.f32 %v696, 0.5
        %v1007 = vmul.f32 %v767, 0.5
        %v1008 = vmul.f32 %v769, 0.5
        %v1009 = vmul.f32 %v840, 0.5
        %v1010 = vmul.f32 %v842, 0.5
        %v1011 = vmul.f32 %v913, 0.5
        %v1012 = vmul.f32 %v915, 0.5
        %v1013 = vtanh.pop %v917
        %v1014 = vtanh.pop %v918
        %v1015 = vtanh.pop %v919
        %v1016 = vtanh.pop %v920
        %v1017 = vtanh.pop %v921
        %v1018 = vtanh.pop %v922
        %v1019 = vtanh.pop %v923
        %v1020 = vtanh.pop %v924
        %v1021 = vtanh.pop %v925
        %v1022 = vtanh.pop %v926
        %v1023 = vtanh.pop %v927
        %v1024 = vtanh.pop %v928
        %v1025 = vtanh.pop %v929
        %v1026 = vtanh.pop %v930
        %v1027 = vtanh.pop %v931
        %v1028 = vtanh.pop %v932
        %v1029 = vtanh.pop %v933
        %v1030 = vtanh.pop %v934
        %v1031 = vtanh.pop %v935
        %v1032 = vtanh.pop %v936
        %v1033 = vtanh.pop %v937
        %v1034 = vtanh.pop %v938
        %v1035 = vtanh.pop %v939
        %v1036 = vtanh.pop %v940
        %v1037 = vtanh.pop %v941
        %v1038 = vtanh.pop %v942
        %v1039 = vtanh.pop %v943
        %v1040 = vtanh.pop %v944
        %v1041 = vtanh.pop %v945
        %v1042 = vtanh.pop %v946
        %v1043 = vtanh.pop %v947
        %v1044 = vtanh.pop %v948
        %v1045 = vtanh.pop %v949
        %v1046 = vtanh.pop %v950
        %v1047 = vtanh.pop %v951
        %v1048 = vtanh.pop %v952
        %v1049 = vtanh.pop %v953
        %v1050 = vtanh.pop %v954
        %v1051 = vtanh.pop %v955
        %v1052 = vtanh.pop %v956
        %v1053 = vtanh.pop %v957
        %v1054 = vtanh.pop %v958
        %v1055 = vtanh.pop %v959
        %v1056 = vtanh.pop %v960
        %v1057 = vtanh.pop %v961
        %v1058 = vtanh.pop %v962
        %v1059 = vtanh.pop %v963
        %v1060 = vtanh.pop %v964
        %v1061 = vtanh.pop %v965
        %v1062 = vtanh.pop %v966
        %v1063 = vtanh.pop %v967
        %v1064 = vtanh.pop %v968
        %v1065 = vtanh.pop %v969
        %v1066 = vtanh.pop %v970
        %v1067 = vtanh.pop %v971
        %v1068 = vtanh.pop %v972
        %v1069 = vtanh.pop %v973
        %v1070 = vtanh.pop %v974
        %v1071 = vtanh.pop %v975
        %v1072 = vtanh.pop %v976
        %v1073 = vtanh.pop %v977
        %v1074 = vtanh.pop %v978
        %v1075 = vtanh.pop %v979
        %v1076 = vtanh.pop %v980
        %v1077 = vtanh.pop %v981
        %v1078 = vtanh.pop %v982
        %v1079 = vtanh.pop %v983
        %v1080 = vtanh.pop %v984
        %v1081 = vtanh.pop %v985
        %v1082 = vtanh.pop %v986
        %v1083 = vtanh.pop %v987
        %v1084 = vtanh.pop %v988
        %v1085 = vtanh.pop %v989
        %v1086 = vtanh.pop %v990
        %v1087 = vtanh.pop %v991
        %v1088 = vtanh.pop %v992
        %v1089 = vtanh.pop %v993
        %v1090 = vtanh.pop %v994
        %v1091 = vtanh.pop %v995
        %v1092 = vtanh.pop %v996
        %v1093 = vtanh.pop %v997
        %v1094 = vtanh.pop %v998
        %v1095 = vtanh.pop %v999
        %v1096 = vtanh.pop %v1000
        %v1097 = vtanh.pop %v1001
        %v1098 = vtanh.pop %v1002
        %v1099 = vtanh.pop %v1003
        %v1100 = vtanh.pop %v1004
        %v1101 = vtanh.pop %v1005
        %v1102 = vtanh.pop %v1006
        %v1103 = vtanh.pop %v1007
        %v1104 = vtanh.pop %v1008
        %v1105 = vtanh.pop %v1009
        %v1106 = vtanh.pop %v1010
        %v1107 = vtanh.pop %v1011
        %v1108 = vtanh.pop %v1012
        %v1109 = vadd.f32 %v1013, 1.0
        %v1110 = vadd.f32 %v1014, 1.0
        %v1111 = vadd.f32 %v1015, 1.0
        %v1112 = vadd.f32 %v1016, 1.0
        %v1113 = vadd.f32 %v1017, 1.0
        %v1114 = vadd.f32 %v1018, 1.0
        %v1115 = vadd.f32 %v1019, 1.0
        %v1116 = vadd.f32 %v1020, 1.0
        %v1117 = vadd.f32 %v1021, 1.0
        %v1118 = vadd.f32 %v1022, 1.0
        %v1119 = vadd.f32 %v1023, 1.0
        %v1120 = vadd.f32 %v1024, 1.0
        %v1121 = vadd.f32 %v1025, 1.0
        %v1122 = vadd.f32 %v1026, 1.0
        %v1123 = vadd.f32 %v1027, 1.0
        %v1124 = vadd.f32 %v1028, 1.0
        %v1125 = vadd.f32 %v1029, 1.0
        %v1126 = vadd.f32 %v1030, 1.0
        %v1127 = vadd.f32 %v1031, 1.0
        %v1128 = vadd.f32 %v1032, 1.0
        %v1129 = vadd.f32 %v1033, 1.0
        %v1130 = vadd.f32 %v1034, 1.0
        %v1131 = vadd.f32 %v1035, 1.0
        %v1132 = vadd.f32 %v1036, 1.0
        %v1133 = vadd.f32 %v1037, 1.0
        %v1134 = vadd.f32 %v1038, 1.0
        %v1135 = vadd.f32 %v1039, 1.0
        %v1136 = vadd.f32 %v1040, 1.0
        %v1137 = vadd.f32 %v1041, 1.0
        %v1138 = vadd.f32 %v1042, 1.0
        %v1139 = vadd.f32 %v1043, 1.0
        %v1140 = vadd.f32 %v1044, 1.0
        %v1141 = vadd.f32 %v1045, 1.0
        %v1142 = vadd.f32 %v1046, 1.0
        %v1143 = vadd.f32 %v1047, 1.0
        %v1144 = vadd.f32 %v1048, 1.0
        %v1145 = vadd.f32 %v1049, 1.0
        %v1146 = vadd.f32 %v1050, 1.0
        %v1147 = vadd.f32 %v1051, 1.0
        %v1148 = vadd.f32 %v1052, 1.0
        %v1149 = vadd.f32 %v1053, 1.0
        %v1150 = vadd.f32 %v1054, 1.0
        %v1151 = vadd.f32 %v1055, 1.0
        %v1152 = vadd.f32 %v1056, 1.0
        %v1153 = vadd.f32 %v1057, 1.0
        %v1154 = vadd.f32 %v1058, 1.0
        %v1155 = vadd.f32 %v1059, 1.0
        %v1156 = vadd.f32 %v1060, 1.0
        %v1157 = vadd.f32 %v1061, 1.0
        %v1158 = vadd.f32 %v1062, 1.0
        %v1159 = vadd.f32 %v1063, 1.0
        %v1160 = vadd.f32 %v1064, 1.0
        %v1161 = vadd.f32 %v1065, 1.0
        %v1162 = vadd.f32 %v1066, 1.0
        %v1163 = vadd.f32 %v1067, 1.0
        %v1164 = vadd.f32 %v1068, 1.0
        %v1165 = vadd.f32 %v1069, 1.0
        %v1166 = vadd.f32 %v1070, 1.0
        %v1167 = vadd.f32 %v1071, 1.0
        %v1168 = vadd.f32 %v1072, 1.0
        %v1169 = vadd.f32 %v1073, 1.0
        %v1170 = vadd.f32 %v1074, 1.0
        %v1171 = vadd.f32 %v1075, 1.0
        %v1172 = vadd.f32 %v1076, 1.0
        %v1173 = vadd.f32 %v1077, 1.0
        %v1174 = vadd.f32 %v1078, 1.0
        %v1175 = vadd.f32 %v1079, 1.0
        %v1176 = vadd.f32 %v1080, 1.0
        %v1177 = vadd.f32 %v1081, 1.0
        %v1178 = vadd.f32 %v1082, 1.0
        %v1179 = vadd.f32 %v1083, 1.0
        %v1180 = vadd.f32 %v1084, 1.0
        %v1181 = vadd.f32 %v1085, 1.0
        %v1182 = vadd.f32 %v1086, 1.0
        %v1183 = vadd.f32 %v1087, 1.0
        %v1184 = vadd.f32 %v1088, 1.0
        %v1185 = vadd.f32 %v1089, 1.0
        %v1186 = vadd.f32 %v1090, 1.0
        %v1187 = vadd.f32 %v1091, 1.0
        %v1188 = vadd.f32 %v1092, 1.0
        %v1189 = vadd.f32 %v1093, 1.0
        %v1190 = vadd.f32 %v1094, 1.0
        %v1191 = vadd.f32 %v1095, 1.0
        %v1192 = vadd.f32 %v1096, 1.0
        %v1193 = vadd.f32 %v1097, 1.0
        %v1194 = vadd.f32 %v1098, 1.0
        %v1195 = vadd.f32 %v1099, 1.0
        %v1196 = vadd.f32 %v1100, 1.0
        %v1197 = vadd.f32 %v1101, 1.0
        %v1198 = vadd.f32 %v1102, 1.0
        %v1199 = vadd.f32 %v1103, 1.0
        %v1200 = vadd.f32 %v1104, 1.0
        %v1201 = vadd.f32 %v1105, 1.0
        %v1202 = vadd.f32 %v1106, 1.0
        %v1203 = vadd.f32 %v1107, 1.0
        %v1204 = vadd.f32 %v1108, 1.0
        %v1205 = vmul.f32 %v917, %v1109
        %v1206 = vmul.f32 %v918, %v1110
        %v1207 = vmul.f32 %v919, %v1111
        %v1208 = vmul.f32 %v920, %v1112
        %v1209 = vmul.f32 %v921, %v1113
        %v1210 = vmul.f32 %v922, %v1114
        %v1211 = vmul.f32 %v923, %v1115
        %v1212 = vmul.f32 %v924, %v1116
        %v1213 = vmul.f32 %v925, %v1117
        %v1214 = vmul.f32 %v926, %v1118
        %v1215 = vmul.f32 %v927, %v1119
        %v1216 = vmul.f32 %v928, %v1120
        %v1217 = vmul.f32 %v929, %v1121
        %v1218 = vmul.f32 %v930, %v1122
        %v1219 = vmul.f32 %v931, %v1123
        %v1220 = vmul.f32 %v932, %v1124
        %v1221 = vmul.f32 %v933, %v1125
        %v1222 = vmul.f32 %v934, %v1126
        %v1223 = vmul.f32 %v935, %v1127
        %v1224 = vmul.f32 %v936, %v1128
        %v1225 = vmul.f32 %v937, %v1129
        %v1226 = vmul.f32 %v938, %v1130
        %v1227 = vmul.f32 %v939, %v1131
        %v1228 = vmul.f32 %v940, %v1132
        %v1229 = vmul.f32 %v941, %v1133
        %v1230 = vmul.f32 %v942, %v1134
        %v1231 = vmul.f32 %v943, %v1135
        %v1232 = vmul.f32 %v944, %v1136
        %v1233 = vmul.f32 %v945, %v1137
        %v1234 = vmul.f32 %v946, %v1138
        %v1235 = vmul.f32 %v947, %v1139
        %v1236 = vmul.f32 %v948, %v1140
        %v1237 = vmul.f32 %v949, %v1141
        %v1238 = vmul.f32 %v950, %v1142
        %v1239 = vmul.f32 %v951, %v1143
        %v1240 = vmul.f32 %v952, %v1144
        %v1241 = vmul.f32 %v953, %v1145
        %v1242 = vmul.f32 %v954, %v1146
        %v1243 = vmul.f32 %v955, %v1147
        %v1244 = vmul.f32 %v956, %v1148
        %v1245 = vmul.f32 %v957, %v1149
        %v1246 = vmul.f32 %v958, %v1150
        %v1247 = vmul.f32 %v959, %v1151
        %v1248 = vmul.f32 %v960, %v1152
        %v1249 = vmul.f32 %v961, %v1153
        %v1250 = vmul.f32 %v962, %v1154
        %v1251 = vmul.f32 %v963, %v1155
        %v1252 = vmul.f32 %v964, %v1156
        %v1253 = vmul.f32 %v965, %v1157
        %v1254 = vmul.f32 %v966, %v1158
        %v1255 = vmul.f32 %v967, %v1159
        %v1256 = vmul.f32 %v968, %v1160
        %v1257 = vmul.f32 %v969, %v1161
        %v1258 = vmul.f32 %v970, %v1162
        %v1259 = vmul.f32 %v971, %v1163
        %v1260 = vmul.f32 %v972, %v1164
        %v1261 = vmul.f32 %v973, %v1165
        %v1262 = vmul.f32 %v974, %v1166
        %v1263 = vmul.f32 %v975, %v1167
        %v1264 = vmul.f32 %v976, %v1168
        %v1265 = vmul.f32 %v977, %v1169
        %v1266 = vmul.f32 %v978, %v1170
        %v1267 = vmul.f32 %v979, %v1171
        %v1268 = vmul.f32 %v980, %v1172
        %v1269 = vmul.f32 %v981, %v1173
        %v1270 = vmul.f32 %v982, %v1174
        %v1271 = vmul.f32 %v983, %v1175
        %v1272 = vmul.f32 %v984, %v1176
        %v1273 = vmul.f32 %v985, %v1177
        %v1274 = vmul.f32 %v986, %v1178
        %v1275 = vmul.f32 %v987, %v1179
        %v1276 = vmul.f32 %v988, %v1180
        %v1277 = vmul.f32 %v989, %v1181
        %v1278 = vmul.f32 %v990, %v1182
        %v1279 = vmul.f32 %v991, %v1183
        %v1280 = vmul.f32 %v992, %v1184
        %v1281 = vmul.f32 %v993, %v1185
        %v1282 = vmul.f32 %v994, %v1186
        %v1283 = vmul.f32 %v995, %v1187
        %v1284 = vmul.f32 %v996, %v1188
        %v1285 = vmul.f32 %v997, %v1189
        %v1286 = vmul.f32 %v998, %v1190
        %v1287 = vmul.f32 %v999, %v1191
        %v1288 = vmul.f32 %v1000, %v1192
        %v1289 = vmul.f32 %v1001, %v1193
        %v1290 = vmul.f32 %v1002, %v1194
        %v1291 = vmul.f32 %v1003, %v1195
        %v1292 = vmul.f32 %v1004, %v1196
        %v1293 = vmul.f32 %v1005, %v1197
        %v1294 = vmul.f32 %v1006, %v1198
        %v1295 = vmul.f32 %v1007, %v1199
        %v1296 = vmul.f32 %v1008, %v1200
        %v1297 = vmul.f32 %v1009, %v1201
        %v1298 = vmul.f32 %v1010, %v1202
        %v1299 = vmul.f32 %v1011, %v1203
        %v1300 = vmul.f32 %v1012, %v1204
        %v1301 = vld [vmem:[#allocation2] sm:$0xff]
        %v1302 = vld [vmem:[#allocation2 + $0x8] sm:$0xf]
        %vm1303 = vcmask 523264
        %v1305 = vsel %vm1303, 1.0, 0
        %1307 = vmatprep.subr.mxu0 %v1206
        %1308 = vmatpush1.msra.mxu0 %v1205
        %1309 = vmatprep.subr.mxu0 %v1218
        %1310 = vmatpush1.msra.mxu0 %v1217
        %1311 = vmatprep.subr.mxu0 %v1230
        %1312 = vmatpush1.msra.mxu0 %v1229
        %1313 = vmatprep.subr.mxu0 %v1242
        %1314 = vmatpush1.msra.mxu0 %v1241
        %1315 = vmatprep.subr.mxu0 %v1254
        %1316 = vmatpush1.msra.mxu0 %v1253
        %1317 = vmatprep.subr.mxu0 %v1266
        %1318 = vmatpush1.msra.mxu0 %v1265
        %1319 = vmatprep.subr.mxu0 %v1278
        %1320 = vmatpush1.msra.mxu0 %v1277
        %1321 = vmatprep.subr.mxu0 %v1290
        %1322 = vmatpush1.msra.mxu0 %v1289
        %1323 = vmatprep.subr.mxu0 0.0
        %1324 = vmatpush1.msra.mxu0 0.0
        %1325 = vmatprep.subr.mxu0 0.0
        %1326 = vmatpush1.msra.mxu0 0.0
        %1327 = vmatprep.subr.mxu0 0.0
        %1328 = vmatpush1.msra.mxu0 0.0
        %1329 = vmatprep.subr.mxu0 0.0
        %1330 = vmatpush1.msra.mxu0 0.0
        %1331 = vmatprep.subr.mxu0 0.0
        %1332 = vmatpush1.msra.mxu0 0.0
        %1333 = vmatprep.subr.mxu0 0.0
        %1334 = vmatpush1.msra.mxu0 0.0
        %1335 = vmatprep.subr.mxu0 0.0
        %1336 = vmatpush1.msra.mxu0 0.0
        %1337 = vmatprep.subr.mxu0 0.0
        %1338 = vmatpush1.msra.mxu0 0.0
        %1339 = vmatprep.subr.mxu0 0.0
        %1340 = vmatpush1.msra.mxu0 0.0
        %1341 = vmatprep.subr.mxu0 0.0
        %1342 = vmatpush1.msra.mxu0 0.0
        %1343 = vmatprep.subr.mxu0 0.0
        %1344 = vmatpush1.msra.mxu0 0.0
        %1345 = vmatprep.subr.mxu0 0.0
        %1346 = vmatpush1.msra.mxu0 0.0
        %1347 = vmatprep.subr.mxu0 0.0
        %1348 = vmatpush1.msra.mxu0 0.0
        %1349 = vmatprep.subr.mxu0 0.0
        %1350 = vmatpush1.msra.mxu0 0.0
        %1351 = vmatprep.subr.mxu0 0.0
        %1352 = vmatpush1.msra.mxu0 0.0
        %1353 = vmatprep.subr.mxu0 0.0
        %1354 = vmatpush1.msra.mxu0 0.0
        %1355 = vmatprep.subr.mxu0 0.0
        %1356 = vmatpush1.msra.mxu0 0.0
        %1357 = vmatprep.subr.mxu0 0.0
        %1358 = vmatpush1.msra.mxu0 0.0
        %1359 = vmatprep.subr.mxu0 0.0
        %1360 = vmatpush1.msra.mxu0 0.0
        %1361 = vmatprep.subr.mxu0 0.0
        %1362 = vmatpush1.msra.mxu0 0.0
        %1363 = vmatprep.subr.mxu0 0.0
        %1364 = vmatpush1.msra.mxu0 0.0
        %1365 = vmatprep.subr.mxu0 0.0
        %1366 = vmatpush1.msra.mxu0 0.0
        %1367 = vmatprep.subr.mxu0 0.0
        %1368 = vmatpush1.msra.mxu0 0.0
        %1369 = vmatprep.subr.mxu0 0.0
        %1370 = vmatpush1.msra.mxu0 0.0
        %1371 = vmatprep.mubr.f32.mxu0 0.0
        %1372 = vmatmul.mubr.f32.gmra.mrb[0].mxu0 %v1305
        %v1373 = vpop.f32.mrb[0].mxu0
        %v1374 = vadd.f32 0.0, %v1373
        %v1375 = vpop.f32.mrb[0].mxu0
        %v1376 = vadd.f32 0.0, %v1375
        %1377 = vdwg.mxu0
        %1378 = vmatprep.subr.mxu0 %v1208
        %1379 = vmatpush1.msra.mxu0 %v1207
        %1380 = vmatprep.subr.mxu0 %v1220
        %1381 = vmatpush1.msra.mxu0 %v1219
        %1382 = vmatprep.subr.mxu0 %v1232
        %1383 = vmatpush1.msra.mxu0 %v1231
        %1384 = vmatprep.subr.mxu0 %v1244
        %1385 = vmatpush1.msra.mxu0 %v1243
        %1386 = vmatprep.subr.mxu0 %v1256
        %1387 = vmatpush1.msra.mxu0 %v1255
        %1388 = vmatprep.subr.mxu0 %v1268
        %1389 = vmatpush1.msra.mxu0 %v1267
        %1390 = vmatprep.subr.mxu0 %v1280
        %1391 = vmatpush1.msra.mxu0 %v1279
        %1392 = vmatprep.subr.mxu0 %v1292
        %1393 = vmatpush1.msra.mxu0 %v1291
        %1394 = vmatprep.subr.mxu0 0.0
        %1395 = vmatpush1.msra.mxu0 0.0
        %1396 = vmatprep.subr.mxu0 0.0
        %1397 = vmatpush1.msra.mxu0 0.0
        %1398 = vmatprep.subr.mxu0 0.0
        %1399 = vmatpush1.msra.mxu0 0.0
        %1400 = vmatprep.subr.mxu0 0.0
        %1401 = vmatpush1.msra.mxu0 0.0
        %1402 = vmatprep.subr.mxu0 0.0
        %1403 = vmatpush1.msra.mxu0 0.0
        %1404 = vmatprep.subr.mxu0 0.0
        %1405 = vmatpush1.msra.mxu0 0.0
        %1406 = vmatprep.subr.mxu0 0.0
        %1407 = vmatpush1.msra.mxu0 0.0
        %1408 = vmatprep.subr.mxu0 0.0
        %1409 = vmatpush1.msra.mxu0 0.0
        %1410 = vmatprep.subr.mxu0 0.0
        %1411 = vmatpush1.msra.mxu0 0.0
        %1412 = vmatprep.subr.mxu0 0.0
        %1413 = vmatpush1.msra.mxu0 0.0
        %1414 = vmatprep.subr.mxu0 0.0
        %1415 = vmatpush1.msra.mxu0 0.0
        %1416 = vmatprep.subr.mxu0 0.0
        %1417 = vmatpush1.msra.mxu0 0.0
        %1418 = vmatprep.subr.mxu0 0.0
        %1419 = vmatpush1.msra.mxu0 0.0
        %1420 = vmatprep.subr.mxu0 0.0
        %1421 = vmatpush1.msra.mxu0 0.0
        %1422 = vmatprep.subr.mxu0 0.0
        %1423 = vmatpush1.msra.mxu0 0.0
        %1424 = vmatprep.subr.mxu0 0.0
        %1425 = vmatpush1.msra.mxu0 0.0
        %1426 = vmatprep.subr.mxu0 0.0
        %1427 = vmatpush1.msra.mxu0 0.0
        %1428 = vmatprep.subr.mxu0 0.0
        %1429 = vmatpush1.msra.mxu0 0.0
        %1430 = vmatprep.subr.mxu0 0.0
        %1431 = vmatpush1.msra.mxu0 0.0
        %1432 = vmatprep.subr.mxu0 0.0
        %1433 = vmatpush1.msra.mxu0 0.0
        %1434 = vmatprep.subr.mxu0 0.0
        %1435 = vmatpush1.msra.mxu0 0.0
        %1436 = vmatprep.subr.mxu0 0.0
        %1437 = vmatpush1.msra.mxu0 0.0
        %1438 = vmatprep.subr.mxu0 0.0
        %1439 = vmatpush1.msra.mxu0 0.0
        %1440 = vmatprep.subr.mxu0 0.0
        %1441 = vmatpush1.msra.mxu0 0.0
        %1442 = vmatprep.mubr.f32.mxu0 0.0
        %1443 = vmatmul.mubr.f32.gmra.mrb[0].mxu0 %v1305
        %v1444 = vpop.f32.mrb[0].mxu0
        %v1445 = vadd.f32 0.0, %v1444
        %v1446 = vpop.f32.mrb[0].mxu0
        %v1447 = vadd.f32 0.0, %v1446
        %1448 = vdwg.mxu0
        %1449 = vmatprep.subr.mxu0 %v1210
        %1450 = vmatpush1.msra.mxu0 %v1209
        %1451 = vmatprep.subr.mxu0 %v1222
        %1452 = vmatpush1.msra.mxu0 %v1221
        %1453 = vmatprep.subr.mxu0 %v1234
        %1454 = vmatpush1.msra.mxu0 %v1233
        %1455 = vmatprep.subr.mxu0 %v1246
        %1456 = vmatpush1.msra.mxu0 %v1245
        %1457 = vmatprep.subr.mxu0 %v1258
        %1458 = vmatpush1.msra.mxu0 %v1257
        %1459 = vmatprep.subr.mxu0 %v1270
        %1460 = vmatpush1.msra.mxu0 %v1269
        %1461 = vmatprep.subr.mxu0 %v1282
        %1462 = vmatpush1.msra.mxu0 %v1281
        %1463 = vmatprep.subr.mxu0 %v1294
        %1464 = vmatpush1.msra.mxu0 %v1293
        %1465 = vmatprep.subr.mxu0 0.0
        %1466 = vmatpush1.msra.mxu0 0.0
        %1467 = vmatprep.subr.mxu0 0.0
        %1468 = vmatpush1.msra.mxu0 0.0
        %1469 = vmatprep.subr.mxu0 0.0
        %1470 = vmatpush1.msra.mxu0 0.0
        %1471 = vmatprep.subr.mxu0 0.0
        %1472 = vmatpush1.msra.mxu0 0.0
        %1473 = vmatprep.subr.mxu0 0.0
        %1474 = vmatpush1.msra.mxu0 0.0
        %1475 = vmatprep.subr.mxu0 0.0
        %1476 = vmatpush1.msra.mxu0 0.0
        %1477 = vmatprep.subr.mxu0 0.0
        %1478 = vmatpush1.msra.mxu0 0.0
        %1479 = vmatprep.subr.mxu0 0.0
        %1480 = vmatpush1.msra.mxu0 0.0
        %1481 = vmatprep.subr.mxu0 0.0
        %1482 = vmatpush1.msra.mxu0 0.0
        %1483 = vmatprep.subr.mxu0 0.0
        %1484 = vmatpush1.msra.mxu0 0.0
        %1485 = vmatprep.subr.mxu0 0.0
        %1486 = vmatpush1.msra.mxu0 0.0
        %1487 = vmatprep.subr.mxu0 0.0
        %1488 = vmatpush1.msra.mxu0 0.0
        %1489 = vmatprep.subr.mxu0 0.0
        %1490 = vmatpush1.msra.mxu0 0.0
        %1491 = vmatprep.subr.mxu0 0.0
        %1492 = vmatpush1.msra.mxu0 0.0
        %1493 = vmatprep.subr.mxu0 0.0
        %1494 = vmatpush1.msra.mxu0 0.0
        %1495 = vmatprep.subr.mxu0 0.0
        %1496 = vmatpush1.msra.mxu0 0.0
        %1497 = vmatprep.subr.mxu0 0.0
        %1498 = vmatpush1.msra.mxu0 0.0
        %1499 = vmatprep.subr.mxu0 0.0
        %1500 = vmatpush1.msra.mxu0 0.0
        %1501 = vmatprep.subr.mxu0 0.0
        %1502 = vmatpush1.msra.mxu0 0.0
        %1503 = vmatprep.subr.mxu0 0.0
        %1504 = vmatpush1.msra.mxu0 0.0
        %1505 = vmatprep.subr.mxu0 0.0
        %1506 = vmatpush1.msra.mxu0 0.0
        %1507 = vmatprep.subr.mxu0 0.0
        %1508 = vmatpush1.msra.mxu0 0.0
        %1509 = vmatprep.subr.mxu0 0.0
        %1510 = vmatpush1.msra.mxu0 0.0
        %1511 = vmatprep.subr.mxu0 0.0
        %1512 = vmatpush1.msra.mxu0 0.0
        %1513 = vmatprep.mubr.f32.mxu0 0.0
        %1514 = vmatmul.mubr.f32.gmra.mrb[0].mxu0 %v1305
        %v1515 = vpop.f32.mrb[0].mxu0
        %v1516 = vadd.f32 0.0, %v1515
        %v1517 = vpop.f32.mrb[0].mxu0
        %v1518 = vadd.f32 0.0, %v1517
        %1519 = vdwg.mxu0
        %1520 = vmatprep.subr.mxu0 %v1212
        %1521 = vmatpush1.msra.mxu0 %v1211
        %1522 = vmatprep.subr.mxu0 %v1224
        %1523 = vmatpush1.msra.mxu0 %v1223
        %1524 = vmatprep.subr.mxu0 %v1236
        %1525 = vmatpush1.msra.mxu0 %v1235
        %1526 = vmatprep.subr.mxu0 %v1248
        %1527 = vmatpush1.msra.mxu0 %v1247
        %1528 = vmatprep.subr.mxu0 %v1260
        %1529 = vmatpush1.msra.mxu0 %v1259
        %1530 = vmatprep.subr.mxu0 %v1272
        %1531 = vmatpush1.msra.mxu0 %v1271
        %1532 = vmatprep.subr.mxu0 %v1284
        %1533 = vmatpush1.msra.mxu0 %v1283
        %1534 = vmatprep.subr.mxu0 %v1296
        %1535 = vmatpush1.msra.mxu0 %v1295
        %1536 = vmatprep.subr.mxu0 0.0
        %1537 = vmatpush1.msra.mxu0 0.0
        %1538 = vmatprep.subr.mxu0 0.0
        %1539 = vmatpush1.msra.mxu0 0.0
        %1540 = vmatprep.subr.mxu0 0.0
        %1541 = vmatpush1.msra.mxu0 0.0
        %1542 = vmatprep.subr.mxu0 0.0
        %1543 = vmatpush1.msra.mxu0 0.0
        %1544 = vmatprep.subr.mxu0 0.0
        %1545 = vmatpush1.msra.mxu0 0.0
        %1546 = vmatprep.subr.mxu0 0.0
        %1547 = vmatpush1.msra.mxu0 0.0
        %1548 = vmatprep.subr.mxu0 0.0
        %1549 = vmatpush1.msra.mxu0 0.0
        %1550 = vmatprep.subr.mxu0 0.0
        %1551 = vmatpush1.msra.mxu0 0.0
        %1552 = vmatprep.subr.mxu0 0.0
        %1553 = vmatpush1.msra.mxu0 0.0
        %1554 = vmatprep.subr.mxu0 0.0
        %1555 = vmatpush1.msra.mxu0 0.0
        %1556 = vmatprep.subr.mxu0 0.0
        %1557 = vmatpush1.msra.mxu0 0.0
        %1558 = vmatprep.subr.mxu0 0.0
        %1559 = vmatpush1.msra.mxu0 0.0
        %1560 = vmatprep.subr.mxu0 0.0
        %1561 = vmatpush1.msra.mxu0 0.0
        %1562 = vmatprep.subr.mxu0 0.0
        %1563 = vmatpush1.msra.mxu0 0.0
        %1564 = vmatprep.subr.mxu0 0.0
        %1565 = vmatpush1.msra.mxu0 0.0
        %1566 = vmatprep.subr.mxu0 0.0
        %1567 = vmatpush1.msra.mxu0 0.0
        %1568 = vmatprep.subr.mxu0 0.0
        %1569 = vmatpush1.msra.mxu0 0.0
        %1570 = vmatprep.subr.mxu0 0.0
        %1571 = vmatpush1.msra.mxu0 0.0
        %1572 = vmatprep.subr.mxu0 0.0
        %1573 = vmatpush1.msra.mxu0 0.0
        %1574 = vmatprep.subr.mxu0 0.0
        %1575 = vmatpush1.msra.mxu0 0.0
        %1576 = vmatprep.subr.mxu0 0.0
        %1577 = vmatpush1.msra.mxu0 0.0
        %1578 = vmatprep.subr.mxu0 0.0
        %1579 = vmatpush1.msra.mxu0 0.0
        %1580 = vmatprep.subr.mxu0 0.0
        %1581 = vmatpush1.msra.mxu0 0.0
        %1582 = vmatprep.subr.mxu0 0.0
        %1583 = vmatpush1.msra.mxu0 0.0
        %1584 = vmatprep.mubr.f32.mxu0 0.0
        %1585 = vmatmul.mubr.f32.gmra.mrb[0].mxu0 %v1305
        %v1586 = vpop.f32.mrb[0].mxu0
        %v1587 = vadd.f32 0.0, %v1586
        %v1588 = vpop.f32.mrb[0].mxu0
        %v1589 = vadd.f32 0.0, %v1588
        %1590 = vdwg.mxu0
        %1591 = vmatprep.subr.mxu0 %v1214
        %1592 = vmatpush1.msra.mxu0 %v1213
        %1593 = vmatprep.subr.mxu0 %v1226
        %1594 = vmatpush1.msra.mxu0 %v1225
        %1595 = vmatprep.subr.mxu0 %v1238
        %1596 = vmatpush1.msra.mxu0 %v1237
        %1597 = vmatprep.subr.mxu0 %v1250
        %1598 = vmatpush1.msra.mxu0 %v1249
        %1599 = vmatprep.subr.mxu0 %v1262
        %1600 = vmatpush1.msra.mxu0 %v1261
        %1601 = vmatprep.subr.mxu0 %v1274
        %1602 = vmatpush1.msra.mxu0 %v1273
        %1603 = vmatprep.subr.mxu0 %v1286
        %1604 = vmatpush1.msra.mxu0 %v1285
        %1605 = vmatprep.subr.mxu0 %v1298
        %1606 = vmatpush1.msra.mxu0 %v1297
        %1607 = vmatprep.subr.mxu0 0.0
        %1608 = vmatpush1.msra.mxu0 0.0
        %1609 = vmatprep.subr.mxu0 0.0
        %1610 = vmatpush1.msra.mxu0 0.0
        %1611 = vmatprep.subr.mxu0 0.0
        %1612 = vmatpush1.msra.mxu0 0.0
        %1613 = vmatprep.subr.mxu0 0.0
        %1614 = vmatpush1.msra.mxu0 0.0
        %1615 = vmatprep.subr.mxu0 0.0
        %1616 = vmatpush1.msra.mxu0 0.0
        %1617 = vmatprep.subr.mxu0 0.0
        %1618 = vmatpush1.msra.mxu0 0.0
        %1619 = vmatprep.subr.mxu0 0.0
        %1620 = vmatpush1.msra.mxu0 0.0
        %1621 = vmatprep.subr.mxu0 0.0
        %1622 = vmatpush1.msra.mxu0 0.0
        %1623 = vmatprep.subr.mxu0 0.0
        %1624 = vmatpush1.msra.mxu0 0.0
        %1625 = vmatprep.subr.mxu0 0.0
        %1626 = vmatpush1.msra.mxu0 0.0
        %1627 = vmatprep.subr.mxu0 0.0
        %1628 = vmatpush1.msra.mxu0 0.0
        %1629 = vmatprep.subr.mxu0 0.0
        %1630 = vmatpush1.msra.mxu0 0.0
        %1631 = vmatprep.subr.mxu0 0.0
        %1632 = vmatpush1.msra.mxu0 0.0
        %1633 = vmatprep.subr.mxu0 0.0
        %1634 = vmatpush1.msra.mxu0 0.0
        %1635 = vmatprep.subr.mxu0 0.0
        %1636 = vmatpush1.msra.mxu0 0.0
        %1637 = vmatprep.subr.mxu0 0.0
        %1638 = vmatpush1.msra.mxu0 0.0
        %1639 = vmatprep.subr.mxu0 0.0
        %1640 = vmatpush1.msra.mxu0 0.0
        %1641 = vmatprep.subr.mxu0 0.0
        %1642 = vmatpush1.msra.mxu0 0.0
        %1643 = vmatprep.subr.mxu0 0.0
        %1644 = vmatpush1.msra.mxu0 0.0
        %1645 = vmatprep.subr.mxu0 0.0
        %1646 = vmatpush1.msra.mxu0 0.0
        %1647 = vmatprep.subr.mxu0 0.0
        %1648 = vmatpush1.msra.mxu0 0.0
        %1649 = vmatprep.subr.mxu0 0.0
        %1650 = vmatpush1.msra.mxu0 0.0
        %1651 = vmatprep.subr.mxu0 0.0
        %1652 = vmatpush1.msra.mxu0 0.0
        %1653 = vmatprep.subr.mxu0 0.0
        %1654 = vmatpush1.msra.mxu0 0.0
        %1655 = vmatprep.mubr.f32.mxu0 0.0
        %1656 = vmatmul.mubr.f32.gmra.mrb[0].mxu0 %v1305
        %v1657 = vpop.f32.mrb[0].mxu0
        %v1658 = vadd.f32 0.0, %v1657
        %v1659 = vpop.f32.mrb[0].mxu0
        %v1660 = vadd.f32 0.0, %v1659
        %1661 = vdwg.mxu0
        %1662 = vmatprep.subr.mxu0 %v1216
        %1663 = vmatpush1.msra.mxu0 %v1215
        %1664 = vmatprep.subr.mxu0 %v1228
        %1665 = vmatpush1.msra.mxu0 %v1227
        %1666 = vmatprep.subr.mxu0 %v1240
        %1667 = vmatpush1.msra.mxu0 %v1239
        %1668 = vmatprep.subr.mxu0 %v1252
        %1669 = vmatpush1.msra.mxu0 %v1251
        %1670 = vmatprep.subr.mxu0 %v1264
        %1671 = vmatpush1.msra.mxu0 %v1263
        %1672 = vmatprep.subr.mxu0 %v1276
        %1673 = vmatpush1.msra.mxu0 %v1275
        %1674 = vmatprep.subr.mxu0 %v1288
        %1675 = vmatpush1.msra.mxu0 %v1287
        %1676 = vmatprep.subr.mxu0 %v1300
        %1677 = vmatpush1.msra.mxu0 %v1299
        %1678 = vmatprep.subr.mxu0 0.0
        %1679 = vmatpush1.msra.mxu0 0.0
        %1680 = vmatprep.subr.mxu0 0.0
        %1681 = vmatpush1.msra.mxu0 0.0
        %1682 = vmatprep.subr.mxu0 0.0
        %1683 = vmatpush1.msra.mxu0 0.0
        %1684 = vmatprep.subr.mxu0 0.0
        %1685 = vmatpush1.msra.mxu0 0.0
        %1686 = vmatprep.subr.mxu0 0.0
        %1687 = vmatpush1.msra.mxu0 0.0
        %1688 = vmatprep.subr.mxu0 0.0
        %1689 = vmatpush1.msra.mxu0 0.0
        %1690 = vmatprep.subr.mxu0 0.0
        %1691 = vmatpush1.msra.mxu0 0.0
        %1692 = vmatprep.subr.mxu0 0.0
        %1693 = vmatpush1.msra.mxu0 0.0
        %1694 = vmatprep.subr.mxu0 0.0
        %1695 = vmatpush1.msra.mxu0 0.0
        %1696 = vmatprep.subr.mxu0 0.0
        %1697 = vmatpush1.msra.mxu0 0.0
        %1698 = vmatprep.subr.mxu0 0.0
        %1699 = vmatpush1.msra.mxu0 0.0
        %1700 = vmatprep.subr.mxu0 0.0
        %1701 = vmatpush1.msra.mxu0 0.0
        %1702 = vmatprep.subr.mxu0 0.0
        %1703 = vmatpush1.msra.mxu0 0.0
        %1704 = vmatprep.subr.mxu0 0.0
        %1705 = vmatpush1.msra.mxu0 0.0
        %1706 = vmatprep.subr.mxu0 0.0
        %1707 = vmatpush1.msra.mxu0 0.0
        %1708 = vmatprep.subr.mxu0 0.0
        %1709 = vmatpush1.msra.mxu0 0.0
        %1710 = vmatprep.subr.mxu0 0.0
        %1711 = vmatpush1.msra.mxu0 0.0
        %1712 = vmatprep.subr.mxu0 0.0
        %1713 = vmatpush1.msra.mxu0 0.0
        %1714 = vmatprep.subr.mxu0 0.0
        %1715 = vmatpush1.msra.mxu0 0.0
        %1716 = vmatprep.subr.mxu0 0.0
        %1717 = vmatpush1.msra.mxu0 0.0
        %1718 = vmatprep.subr.mxu0 0.0
        %1719 = vmatpush1.msra.mxu0 0.0
        %1720 = vmatprep.subr.mxu0 0.0
        %1721 = vmatpush1.msra.mxu0 0.0
        %1722 = vmatprep.subr.mxu0 0.0
        %1723 = vmatpush1.msra.mxu0 0.0
        %1724 = vmatprep.subr.mxu0 0.0
        %1725 = vmatpush1.msra.mxu0 0.0
        %1726 = vmatprep.mubr.f32.mxu0 0.0
        %1727 = vmatmul.mubr.f32.gmra.mrb[0].mxu0 %v1305
        %v1728 = vpop.f32.mrb[0].mxu0
        %v1729 = vadd.f32 0.0, %v1728
        %v1730 = vpop.f32.mrb[0].mxu0
        %v1731 = vadd.f32 0.0, %v1730
        %1732 = vdwg.mxu0
        %v1745 = vcombine.low %v1374, %v1376
        %v1746 = vcombine.low %v1445, %v1447
        %v1747 = vcombine.low %v1516, %v1518
        %v1748 = vcombine.low %v1587, %v1589
        %v1750 = vunpack.c.l.s4 1966171168
        %v1751 = vunpack.c.0.s8 %v1750
        %v1752 = vlaneseq
        %v1753 = vshrl.u32 %v1752, 7
        %v1754 = vsub.s32 %v1751, %v1753
        %v1755 = vrot.slane %v1745, %v1754
        %v1757 = vunpack.c.l.s4 1966171168
        %v1758 = vunpack.c.0.s8 %v1757
        %v1759 = vlaneseq
        %v1760 = vshrl.u32 %v1759, 7
        %v1761 = vsub.s32 %v1758, %v1760
        %v1762 = vrot.slane %v1746, %v1761
        %v1764 = vunpack.c.l.s4 1966171168
        %v1765 = vunpack.c.0.s8 %v1764
        %v1766 = vlaneseq
        %v1767 = vshrl.u32 %v1766, 7
        %v1768 = vsub.s32 %v1765, %v1767
        %v1769 = vrot.slane %v1747, %v1768
        %v1771 = vunpack.c.l.s4 1966171168
        %v1772 = vunpack.c.0.s8 %v1771
        %v1773 = vlaneseq
        %v1774 = vshrl.u32 %v1773, 7
        %v1775 = vsub.s32 %v1772, %v1774
        %v1776 = vrot.slane %v1748, %v1775
        %v1777 = vcombine.low %v1755, %v1762
        %v1778 = vcombine.low %v1769, %v1776
        %v1780 = vunpack.c.l.s4 1966171168
        %v1781 = vunpack.c.0.s8 %v1780
        %v1782 = vlaneseq
        %v1783 = vshrl.u32 %v1782, 7
        %v1784 = vsub.s32 %v1781, %v1783
        %v1785 = vrot.slane %v1777, %v1784
        %v1787 = vunpack.c.l.s4 1966171168
        %v1788 = vunpack.c.0.s8 %v1787
        %v1789 = vlaneseq
        %v1790 = vshrl.u32 %v1789, 7
        %v1791 = vsub.s32 %v1788, %v1790
        %v1792 = vrot.slane %v1778, %v1791
        %v1793 = vcombine.low %v1785, %v1792
        %v1794 = vcombine.low %v1658, %v1660
        %v1795 = vcombine.low %v1729, %v1731
        %v1797 = vunpack.c.l.s4 1966171168
        %v1798 = vunpack.c.0.s8 %v1797
        %v1799 = vlaneseq
        %v1800 = vshrl.u32 %v1799, 7
        %v1801 = vsub.s32 %v1798, %v1800
        %v1802 = vrot.slane %v1794, %v1801
        %v1804 = vunpack.c.l.s4 1966171168
        %v1805 = vunpack.c.0.s8 %v1804
        %v1806 = vlaneseq
        %v1807 = vshrl.u32 %v1806, 7
        %v1808 = vsub.s32 %v1805, %v1807
        %v1809 = vrot.slane %v1795, %v1808
        %v1810 = vcombine.low %v1802, %v1809
        %v1812 = vunpack.c.l.s4 1966171168
        %v1813 = vunpack.c.0.s8 %v1812
        %v1814 = vlaneseq
        %v1815 = vshrl.u32 %v1814, 7
        %v1816 = vsub.s32 %v1813, %v1815
        %v1817 = vrot.slane %v1810, %v1816
        %v1820 = vadd.f32 %v1301, %v1793
        %v1821 = vadd.f32 %v1302, %v1817
        %1822 = vst [vmem:[#allocation2] sm:$0xff] %v1820
        %v1823 = vlaneseq
        %vm1824 = vcmp.ge.s32.totalorder %v1823, 0
        %vm1825 = vcmp.lt.s32.totalorder %v1823, 512
        %vm1826 = vmand %vm1824, %vm1825
        %1827 = vst.msk [vmem:[#allocation2 + $0x8] sm:$0xf] %vm1826, %v1821
        // Predicated region
        $region49: #{tpu_custom_call.1} parent=39 // pred_check
          %p1828 = pneg %p267
        $region50: #{tpu_custom_call.1} parent=39 // pred_check_branch
          %1830 = sbr.rel (%p1828) target = $region52
        $region51: #{tpu_custom_call.1} parent=39 // pred_region
          %v1831 = vld [vmem:[#allocation2] sm:$0xff]
          %v1832 = vld [vmem:[#allocation2 + $0x8] sm:$0xf]
          %v1833 = vmul.f32 %v1831, 0.015625
          %v1834 = vmul.f32 %v1832, 0.015625
          %v1835 = vld [vmem:[%s3] sm:$0xff]
          %v1836 = vld [vmem:[%s3 + $0x8] sm:$0xf]
          %v1837 = vmul.f32 %v1833, %v1835
          %v1838 = vmul.f32 %v1834, %v1836
          %v1841 = vlaneseq
          %v1842 = vshrl.u32 %v1841, 7
          %v1843 = vsub.s32 0, %v1842
          %v1844 = vrot.slane %v1837, %v1843
          %v1845 = vlaneseq
          %v1846 = vshrl.u32 %v1845, 7
          %v1847 = vsub.s32 1, %v1846
          %v1848 = vrot.slane %v1837, %v1847
          %v1849 = vlaneseq
          %v1850 = vshrl.u32 %v1849, 7
          %v1851 = vsub.s32 2, %v1850
          %v1852 = vrot.slane %v1837, %v1851
          %v1853 = vlaneseq
          %v1854 = vshrl.u32 %v1853, 7
          %v1855 = vsub.s32 3, %v1854
          %v1856 = vrot.slane %v1837, %v1855
          %v1857 = vlaneseq
          %v1858 = vshrl.u32 %v1857, 7
          %v1859 = vsub.s32 4, %v1858
          %v1860 = vrot.slane %v1837, %v1859
          %v1861 = vlaneseq
          %v1862 = vshrl.u32 %v1861, 7
          %v1863 = vsub.s32 5, %v1862
          %v1864 = vrot.slane %v1837, %v1863
          %v1865 = vlaneseq
          %v1866 = vshrl.u32 %v1865, 7
          %v1867 = vsub.s32 6, %v1866
          %v1868 = vrot.slane %v1837, %v1867
          %v1869 = vlaneseq
          %v1870 = vshrl.u32 %v1869, 7
          %v1871 = vsub.s32 7, %v1870
          %v1872 = vrot.slane %v1837, %v1871
          %v1873 = vlaneseq
          %v1874 = vshrl.u32 %v1873, 7
          %v1875 = vsub.s32 0, %v1874
          %v1876 = vrot.slane %v1838, %v1875
          %v1877 = vlaneseq
          %v1878 = vshrl.u32 %v1877, 7
          %v1879 = vsub.s32 1, %v1878
          %v1880 = vrot.slane %v1838, %v1879
          %v1881 = vlaneseq
          %v1882 = vshrl.u32 %v1881, 7
          %v1883 = vsub.s32 2, %v1882
          %v1884 = vrot.slane %v1838, %v1883
          %v1885 = vlaneseq
          %v1886 = vshrl.u32 %v1885, 7
          %v1887 = vsub.s32 3, %v1886
          %v1888 = vrot.slane %v1838, %v1887
          %vm1901 = vcmask 1040384
          %v1902 = vsel %vm1901, %v1844, 0.0
          %v1903 = vsel %vm1901, %v1848, 0.0
          %v1904 = vadd.f32 %v1902, %v1903
          %v1905 = vsel %vm1901, %v1852, 0.0
          %v1906 = vadd.f32 %v1904, %v1905
          %v1907 = vsel %vm1901, %v1856, 0.0
          %v1908 = vadd.f32 %v1906, %v1907
          %v1909 = vsel %vm1901, %v1860, 0.0
          %v1910 = vadd.f32 %v1908, %v1909
          %v1911 = vsel %vm1901, %v1864, 0.0
          %v1912 = vadd.f32 %v1910, %v1911
          %v1913 = vsel %vm1901, %v1868, 0.0
          %v1914 = vadd.f32 %v1912, %v1913
          %v1915 = vsel %vm1901, %v1872, 0.0
          %v1916 = vadd.f32 %v1914, %v1915
          %v1917 = vsel %vm1901, %v1876, 0.0
          %v1918 = vadd.f32 %v1916, %v1917
          %v1919 = vsel %vm1901, %v1880, 0.0
          %v1920 = vadd.f32 %v1918, %v1919
          %v1921 = vsel %vm1901, %v1884, 0.0
          %v1922 = vadd.f32 %v1920, %v1921
          %v1923 = vsel %vm1901, %v1888, 0.0
          %v1924 = vadd.f32 %v1922, %v1923
          %1925 = vadd.xlane.f32.xlu0 %v1924
          %v1926 = vpop.xlane.xlu0 %1925
          %v1927 = vld [vmem:[#allocation3] sm:$0x1]
          %v1928 = vadd.f32 %v1926, %v1927
          %vm1929 = vcmask 0
          %1930 = vst.msk [vmem:[%s265] sm:$0x1] %vm1929, %v1928
        $region52: #{tpu_custom_call.1} parent=39 // pred_fallthru
          _
        %p1931 = scmp.lt.s32.totalorder %s23, 1
        %s1932 = scalar_select %p1931, %s23, 1
        %s1933 = scalar_lea.vmem %s5, %s1932
        // Predicated region
        $region53: #{tpu_custom_call.1} parent=39 // pred_check
          %p1934 = pneg %p161
        $region54: #{tpu_custom_call.1} parent=39 // pred_check_branch
          %1936 = sbr.rel (%p1934) target = $region56
        $region55: #{tpu_custom_call.1} parent=39 // pred_region
          _
        $region56: #{tpu_custom_call.1} parent=39 // pred_fallthru
          _
      $region40: #{tpu_custom_call.1} parent=5 // pred_fallthru
        _
      %p1937 = scmp.le.s32.totalorder 2, %s14
      // Predicated region
      $region57: #{tpu_custom_call.1} parent=5 // pred_check
        %p1938 = pneg %p1937
      $region58: #{tpu_custom_call.1} parent=5 // pred_check_branch
        %1940 = sbr.rel (%p1938) target = $region60
      $region59: #{tpu_custom_call.1} parent=5 // pred_region
        %s1941 = ssub.s32 %s14, 2
        // Predicated region
        $region61: #{tpu_custom_call.1} parent=59 // pred_check
          %p1942 = pneg %p167
        $region62: #{tpu_custom_call.1} parent=59 // pred_check_branch
          %1944 = sbr.rel (%p1942) target = $region64
        $region63: #{tpu_custom_call.1} parent=59 // pred_region
          %p1945 = scmp.lt.s32.totalorder %s25, 1
          %s1946 = scalar_select %p1945, %s25, 1
          %s1947 = scalar_lea.vmem %s5, %s1946
        $region64: #{tpu_custom_call.1} parent=59 // pred_fallthru
          _
      $region60: #{tpu_custom_call.1} parent=5 // pred_fallthru
        _
    $region6: #{tpu_custom_call.1} parent=1 // loop_footer
      %s18 = sadd.s32 1, %s14
    $region7: #{tpu_custom_call.1} parent=1 // loop_footer_branch
      %13 = sbr.rel target = $region3
    $region8: #{tpu_custom_call.1} parent=1 // loop_exit
      _
    %1948 = vsyncpa [#allocation5], 1
    %s1949 = scalar_lea.sflag [#allocation5], 1
    %1950 = vsyncpa %s1949, 1

</llo_original>
